<compile_context>
chip_gen: v7x
topology: tpu7x:2x2x1
jax: 0.10.0
libtpu: 0.0.40
codegen_flags: <defaults>
</compile_context>

<pallas_src>
import jax
import jax.numpy as jnp
from jax import lax
from jax.experimental import pallas as pl
from jax.experimental.pallas import tpu as pltpu


DEPTH = 8  # outstanding row-gather DMAs (each row is only H*4 B -> latency bound)


def embedding_kernel(ids_ref, word_hbm, pos_ref, out_ref, gbuf, copy_sems):
    # ids_ref  : SMEM (B * S_pad,) int32   flattened, scalar-prefetched token ids
    # word_hbm : HBM  (V, H)               full word table, no auto-DMA
    # pos_ref  : VMEM (TILE_S, H)          positional rows for this sequence tile
    # out_ref  : VMEM (TILE_S, H)          output tile for (batch b, seq tile j)
    # gbuf     : VMEM (TILE_S, H)          gathered word-embedding rows
    # copy_sems: DMA semaphores, DEPTH slots, cycled
    b = pl.program_id(0)
    j = pl.program_id(1)
    tile_s, _ = gbuf.shape
    s_pad = pl.num_programs(1) * tile_s
    base = b * s_pad + j * tile_s

    def start_row(s):
        tok = ids_ref[base + s]
        pltpu.make_async_copy(
            word_hbm.at[pl.ds(tok, 1), :],
            gbuf.at[pl.ds(s, 1), :],
            copy_sems.at[s % DEPTH],
        ).start()

    def wait_row(s):
        pltpu.make_async_copy(
            word_hbm.at[pl.ds(0, 1), :],      # dummy src, wait keys off dst+sem
            gbuf.at[pl.ds(s, 1), :],
            copy_sems.at[s % DEPTH],
        ).wait()

    # Prime the gather window with up to DEPTH outstanding row copies.
    n_prime = min(DEPTH, tile_s)

    def prime_body(s, c):
        start_row(s)
        return c

    lax.fori_loop(0, n_prime, prime_body, 0, unroll=True)

    # Wait for row s, immediately refill the window with row s + DEPTH.
    def main_body(s, c):
        wait_row(s)

        @pl.when(s + DEPTH < tile_s)
        def _():
            start_row(s + DEPTH)

        return c

    lax.fori_loop(0, tile_s, main_body, 0, unroll=8)

    # One dense (TILE_S, H) add + store: full sublane/lane utilization.
    out_ref[...] = gbuf[...] + pos_ref[...]


def embedding_forward(x, word_table, pos_table, *, tile_s=None):
    """x: (B, S) int token ids -> (B, S, H) = word_emb[x] + pos_emb[:S]."""
    B, S = x.shape
    V, H = word_table.shape
    T, _ = pos_table.shape
    assert S <= T, "sequence longer than seq_token_num"

    if tile_s is None:
        tile_s = min(256, max(8, pl.cdiv(S, 8) * 8))
    assert tile_s % 8 == 0
    n_tiles = pl.cdiv(S, tile_s)
    s_pad = n_tiles * tile_s
    dtype = word_table.dtype

    # Clamp ids (an out-of-range id would otherwise become an OOB HBM DMA),
    # pad the sequence axis up to the tile grid, flatten to 1-D for SMEM.
    ids = jnp.clip(x.astype(jnp.int32), 0, V - 1)
    if s_pad != S:
        ids = jnp.pad(ids, ((0, 0), (0, s_pad - S)))
    ids_flat = ids.reshape(B * s_pad)

    # Positional rows used by this sequence, zero-padded to the tile grid so
    # the (tile_s, H) BlockSpec always tiles cleanly.
    pos_used = pos_table[:S]
    if s_pad != S:
        pos_used = jnp.pad(pos_used, ((0, s_pad - S), (0, 0)))

    grid_spec = pltpu.PrefetchScalarGridSpec(
        num_scalar_prefetch=1,  # token ids land in SMEM
        grid=(B, n_tiles),
        in_specs=[
            pl.BlockSpec(memory_space=pl.ANY),                    # word table stays in HBM
            pl.BlockSpec((tile_s, H), lambda b, j, ids: (j, 0)),  # pos rows for tile j
        ],
        out_specs=pl.BlockSpec((None, tile_s, H), lambda b, j, ids: (b, j, 0)),
        scratch_shapes=[
            pltpu.VMEM((tile_s, H), dtype),       # gathered word rows
            pltpu.SemaphoreType.DMA((DEPTH,)),    # cycled row-copy semaphores
        ],
    )

    out = pl.pallas_call(
        embedding_kernel,
        out_shape=jax.ShapeDtypeStruct((B, s_pad, H), dtype),
        grid_spec=grid_spec,
        compiler_params=pltpu.CompilerParams(
            # Each grid step writes a distinct output block, no accumulator:
            # fully parallel (shards over v7x's 2 TCs; harmless on v5e/v6e).
            dimension_semantics=("parallel", "parallel"),
            vmem_limit_bytes=32 * 1024 * 1024,
        ),
    )(ids_flat, word_table, pos_used)

    if s_pad != S:
        out = out[:, :S, :]
    return out
    # TODO(synk): if the downstream layer accepts bf16, store the tables in
    # bf16 to halve HBM traffic (this kernel is purely memory bound).


if __name__ == "__main__":
    # Config (EmbeddingConfig equivalent): small synthetic sizes.
    VOCAB_SIZE = 64       # cfg.vocab_size
    HIDDEN_DIM = 128      # cfg.hidden_dim
    SEQ_TOKEN_NUM = 16    # cfg.seq_token_num
    BATCH = 2
    SEQ = 8               # x.size(1) <= seq_token_num

    key = jax.random.PRNGKey(0)
    k_word, k_pos, k_ids = jax.random.split(key, 3)

    # Deterministic parameter init (nn.Embedding weights ~ N(0, 1)).
    word_table = jax.random.normal(k_word, (VOCAB_SIZE, HIDDEN_DIM), jnp.float32)
    pos_table = jax.random.normal(k_pos, (SEQ_TOKEN_NUM, HIDDEN_DIM), jnp.float32)

    x = jax.random.randint(k_ids, (BATCH, SEQ), 0, VOCAB_SIZE, dtype=jnp.int32)

    out = embedding_forward(x, word_table, pos_table)
    out = jax.block_until_ready(out)

    # Pure-JAX reference for correctness.
    ref = word_table[x] + pos_table[:SEQ][None, :, :]
    assert out.shape == (BATCH, SEQ, HIDDEN_DIM)
    assert out.dtype == jnp.float32
    assert jnp.allclose(out, ref, atol=1e-6, rtol=1e-6)

    print("KERNEL_OK")
</pallas_src>

<mosaic_0001>
module attributes {stable_mosaic.version = 11 : i64} {
  func.func @embedding_kernel(%arg0: i32, %arg1: i32, %arg2: memref<16xi32, #tpu.memory_space<smem>>, %arg3: memref<64x128xf32, #tpu.memory_space<any>>, %arg4: memref<8x128xf32, #tpu.memory_space<vmem>>, %arg5: memref<1x8x128xf32, #tpu.memory_space<vmem>>, %arg6: memref<8x128xf32, #tpu.memory_space<vmem>>, %arg7: memref<8x!tpu.dma_semaphore, #tpu.memory_space<semaphore_mem>>) attributes {dimension_semantics = [#tpu.dimension_semantics<parallel>, #tpu.dimension_semantics<parallel>], iteration_bounds = array<i64: 2, 1>, scalar_prefetch = 1 : i64, scratch_operands = 2 : i64, tpu.core_type = #tpu.core_type<tc>, window_params = [{}, {transform_indices = @transform_1, window_bounds = array<i64: 8, 128>}, {transform_indices = @transform_2, window_bounds = array<i64: 1, 8, 128>}]} {
    %c8_i32 = arith.constant 8 : i32
    %0 = arith.muli %arg0, %c8_i32 : i32
    %c8_i32_0 = arith.constant 8 : i32
    %1 = arith.muli %arg1, %c8_i32_0 : i32
    %2 = arith.addi %0, %1 : i32
    %c0_i32 = arith.constant 0 : i32
    %3 = arith.addi %2, %c0_i32 : i32
    %4 = arith.index_cast %3 : i32 to index
    %5 = memref.load %arg2[%4] : memref<16xi32, #tpu.memory_space<smem>>
    %c8_i32_1 = arith.constant 8 : i32
    %c0_i32_2 = arith.constant 0 : i32
    %6 = arith.cmpi eq, %c8_i32_1, %c0_i32_2 : i32
    %c1_i32 = arith.constant 1 : i32
    %7 = arith.select %6, %c1_i32, %c8_i32_1 : i32
    %8 = arith.remsi %c0_i32, %7 : i32
    %c0_i32_3 = arith.constant 0 : i32
    %9 = arith.cmpi ne, %8, %c0_i32_3 : i32
    %c0_i32_4 = arith.constant 0 : i32
    %10 = arith.cmpi slt, %8, %c0_i32_4 : i32
    %c0_i32_5 = arith.constant 0 : i32
    %11 = arith.cmpi slt, %7, %c0_i32_5 : i32
    %12 = arith.xori %10, %11 : i1
    %13 = arith.andi %12, %9 : i1
    %14 = arith.addi %8, %7 : i32
    %15 = arith.select %13, %14, %8 : i32
    %c0_i32_6 = arith.constant 0 : i32
    %16 = tpu.memref_slice %arg3[%5, %c0_i32_6] : memref<64x128xf32, #tpu.memory_space<any>> -> memref<1x128xf32, #tpu.memory_space<any>>
    %c0_i32_7 = arith.constant 0 : i32
    %17 = tpu.memref_slice %arg6[%c0_i32, %c0_i32_7] : memref<8x128xf32, #tpu.memory_space<vmem>> -> memref<1x128xf32, #tpu.memory_space<vmem>>
    %18 = tpu.memref_slice %arg7[%15] : memref<8x!tpu.dma_semaphore, #tpu.memory_space<semaphore_mem>> -> memref<1x!tpu.dma_semaphore, #tpu.memory_space<semaphore_mem>>
    %19 = tpu.memref_squeeze %18 : memref<1x!tpu.dma_semaphore, #tpu.memory_space<semaphore_mem>> -> memref<!tpu.dma_semaphore, #tpu.memory_space<semaphore_mem>>
    tpu.enqueue_dma source(%16 : memref<1x128xf32, #tpu.memory_space<any>>) target(%17 : memref<1x128xf32, #tpu.memory_space<vmem>>) target_semaphore(%19 : memref<!tpu.dma_semaphore, #tpu.memory_space<semaphore_mem>>)
    %c1_i32_8 = arith.constant 1 : i32
    %20 = arith.addi %2, %c1_i32_8 : i32
    %21 = arith.index_cast %20 : i32 to index
    %22 = memref.load %arg2[%21] : memref<16xi32, #tpu.memory_space<smem>>
    %c8_i32_9 = arith.constant 8 : i32
    %c0_i32_10 = arith.constant 0 : i32
    %23 = arith.cmpi eq, %c8_i32_9, %c0_i32_10 : i32
    %c1_i32_11 = arith.constant 1 : i32
    %24 = arith.select %23, %c1_i32_11, %c8_i32_9 : i32
    %25 = arith.remsi %c1_i32_8, %24 : i32
    %c0_i32_12 = arith.constant 0 : i32
    %26 = arith.cmpi ne, %25, %c0_i32_12 : i32
    %c0_i32_13 = arith.constant 0 : i32
    %27 = arith.cmpi slt, %25, %c0_i32_13 : i32
    %c0_i32_14 = arith.constant 0 : i32
    %28 = arith.cmpi slt, %24, %c0_i32_14 : i32
    %29 = arith.xori %27, %28 : i1
    %30 = arith.andi %29, %26 : i1
    %31 = arith.addi %25, %24 : i32
    %32 = arith.select %30, %31, %25 : i32
    %c0_i32_15 = arith.constant 0 : i32
    %33 = tpu.memref_slice %arg3[%22, %c0_i32_15] : memref<64x128xf32, #tpu.memory_space<any>> -> memref<1x128xf32, #tpu.memory_space<any>>
    %c0_i32_16 = arith.constant 0 : i32
    %34 = tpu.memref_slice %arg6[%c1_i32_8, %c0_i32_16] : memref<8x128xf32, #tpu.memory_space<vmem>> -> memref<1x128xf32, #tpu.memory_space<vmem>>
    %35 = tpu.memref_slice %arg7[%32] : memref<8x!tpu.dma_semaphore, #tpu.memory_space<semaphore_mem>> -> memref<1x!tpu.dma_semaphore, #tpu.memory_space<semaphore_mem>>
    %36 = tpu.memref_squeeze %35 : memref<1x!tpu.dma_semaphore, #tpu.memory_space<semaphore_mem>> -> memref<!tpu.dma_semaphore, #tpu.memory_space<semaphore_mem>>
    tpu.enqueue_dma source(%33 : memref<1x128xf32, #tpu.memory_space<any>>) target(%34 : memref<1x128xf32, #tpu.memory_space<vmem>>) target_semaphore(%36 : memref<!tpu.dma_semaphore, #tpu.memory_space<semaphore_mem>>)
    %c2_i32 = arith.constant 2 : i32
    %37 = arith.addi %2, %c2_i32 : i32
    %38 = arith.index_cast %37 : i32 to index
    %39 = memref.load %arg2[%38] : memref<16xi32, #tpu.memory_space<smem>>
    %c8_i32_17 = arith.constant 8 : i32
    %c0_i32_18 = arith.constant 0 : i32
    %40 = arith.cmpi eq, %c8_i32_17, %c0_i32_18 : i32
    %c1_i32_19 = arith.constant 1 : i32
    %41 = arith.select %40, %c1_i32_19, %c8_i32_17 : i32
    %42 = arith.remsi %c2_i32, %41 : i32
    %c0_i32_20 = arith.constant 0 : i32
    %43 = arith.cmpi ne, %42, %c0_i32_20 : i32
    %c0_i32_21 = arith.constant 0 : i32
    %44 = arith.cmpi slt, %42, %c0_i32_21 : i32
    %c0_i32_22 = arith.constant 0 : i32
    %45 = arith.cmpi slt, %41, %c0_i32_22 : i32
    %46 = arith.xori %44, %45 : i1
    %47 = arith.andi %46, %43 : i1
    %48 = arith.addi %42, %41 : i32
    %49 = arith.select %47, %48, %42 : i32
    %c0_i32_23 = arith.constant 0 : i32
    %50 = tpu.memref_slice %arg3[%39, %c0_i32_23] : memref<64x128xf32, #tpu.memory_space<any>> -> memref<1x128xf32, #tpu.memory_space<any>>
    %c0_i32_24 = arith.constant 0 : i32
    %51 = tpu.memref_slice %arg6[%c2_i32, %c0_i32_24] : memref<8x128xf32, #tpu.memory_space<vmem>> -> memref<1x128xf32, #tpu.memory_space<vmem>>
    %52 = tpu.memref_slice %arg7[%49] : memref<8x!tpu.dma_semaphore, #tpu.memory_space<semaphore_mem>> -> memref<1x!tpu.dma_semaphore, #tpu.memory_space<semaphore_mem>>
    %53 = tpu.memref_squeeze %52 : memref<1x!tpu.dma_semaphore, #tpu.memory_space<semaphore_mem>> -> memref<!tpu.dma_semaphore, #tpu.memory_space<semaphore_mem>>
    tpu.enqueue_dma source(%50 : memref<1x128xf32, #tpu.memory_space<any>>) target(%51 : memref<1x128xf32, #tpu.memory_space<vmem>>) target_semaphore(%53 : memref<!tpu.dma_semaphore, #tpu.memory_space<semaphore_mem>>)
    %c3_i32 = arith.constant 3 : i32
    %54 = arith.addi %2, %c3_i32 : i32
    %55 = arith.index_cast %54 : i32 to index
    %56 = memref.load %arg2[%55] : memref<16xi32, #tpu.memory_space<smem>>
    %c8_i32_25 = arith.constant 8 : i32
    %c0_i32_26 = arith.constant 0 : i32
    %57 = arith.cmpi eq, %c8_i32_25, %c0_i32_26 : i32
    %c1_i32_27 = arith.constant 1 : i32
    %58 = arith.select %57, %c1_i32_27, %c8_i32_25 : i32
    %59 = arith.remsi %c3_i32, %58 : i32
    %c0_i32_28 = arith.constant 0 : i32
    %60 = arith.cmpi ne, %59, %c0_i32_28 : i32
    %c0_i32_29 = arith.constant 0 : i32
    %61 = arith.cmpi slt, %59, %c0_i32_29 : i32
    %c0_i32_30 = arith.constant 0 : i32
    %62 = arith.cmpi slt, %58, %c0_i32_30 : i32
    %63 = arith.xori %61, %62 : i1
    %64 = arith.andi %63, %60 : i1
    %65 = arith.addi %59, %58 : i32
    %66 = arith.select %64, %65, %59 : i32
    %c0_i32_31 = arith.constant 0 : i32
    %67 = tpu.memref_slice %arg3[%56, %c0_i32_31] : memref<64x128xf32, #tpu.memory_space<any>> -> memref<1x128xf32, #tpu.memory_space<any>>
    %c0_i32_32 = arith.constant 0 : i32
    %68 = tpu.memref_slice %arg6[%c3_i32, %c0_i32_32] : memref<8x128xf32, #tpu.memory_space<vmem>> -> memref<1x128xf32, #tpu.memory_space<vmem>>
    %69 = tpu.memref_slice %arg7[%66] : memref<8x!tpu.dma_semaphore, #tpu.memory_space<semaphore_mem>> -> memref<1x!tpu.dma_semaphore, #tpu.memory_space<semaphore_mem>>
    %70 = tpu.memref_squeeze %69 : memref<1x!tpu.dma_semaphore, #tpu.memory_space<semaphore_mem>> -> memref<!tpu.dma_semaphore, #tpu.memory_space<semaphore_mem>>
    tpu.enqueue_dma source(%67 : memref<1x128xf32, #tpu.memory_space<any>>) target(%68 : memref<1x128xf32, #tpu.memory_space<vmem>>) target_semaphore(%70 : memref<!tpu.dma_semaphore, #tpu.memory_space<semaphore_mem>>)
    %c4_i32 = arith.constant 4 : i32
    %71 = arith.addi %2, %c4_i32 : i32
    %72 = arith.index_cast %71 : i32 to index
    %73 = memref.load %arg2[%72] : memref<16xi32, #tpu.memory_space<smem>>
    %c8_i32_33 = arith.constant 8 : i32
    %c0_i32_34 = arith.constant 0 : i32
    %74 = arith.cmpi eq, %c8_i32_33, %c0_i32_34 : i32
    %c1_i32_35 = arith.constant 1 : i32
    %75 = arith.select %74, %c1_i32_35, %c8_i32_33 : i32
    %76 = arith.remsi %c4_i32, %75 : i32
    %c0_i32_36 = arith.constant 0 : i32
    %77 = arith.cmpi ne, %76, %c0_i32_36 : i32
    %c0_i32_37 = arith.constant 0 : i32
    %78 = arith.cmpi slt, %76, %c0_i32_37 : i32
    %c0_i32_38 = arith.constant 0 : i32
    %79 = arith.cmpi slt, %75, %c0_i32_38 : i32
    %80 = arith.xori %78, %79 : i1
    %81 = arith.andi %80, %77 : i1
    %82 = arith.addi %76, %75 : i32
    %83 = arith.select %81, %82, %76 : i32
    %c0_i32_39 = arith.constant 0 : i32
    %84 = tpu.memref_slice %arg3[%73, %c0_i32_39] : memref<64x128xf32, #tpu.memory_space<any>> -> memref<1x128xf32, #tpu.memory_space<any>>
    %c0_i32_40 = arith.constant 0 : i32
    %85 = tpu.memref_slice %arg6[%c4_i32, %c0_i32_40] : memref<8x128xf32, #tpu.memory_space<vmem>> -> memref<1x128xf32, #tpu.memory_space<vmem>>
    %86 = tpu.memref_slice %arg7[%83] : memref<8x!tpu.dma_semaphore, #tpu.memory_space<semaphore_mem>> -> memref<1x!tpu.dma_semaphore, #tpu.memory_space<semaphore_mem>>
    %87 = tpu.memref_squeeze %86 : memref<1x!tpu.dma_semaphore, #tpu.memory_space<semaphore_mem>> -> memref<!tpu.dma_semaphore, #tpu.memory_space<semaphore_mem>>
    tpu.enqueue_dma source(%84 : memref<1x128xf32, #tpu.memory_space<any>>) target(%85 : memref<1x128xf32, #tpu.memory_space<vmem>>) target_semaphore(%87 : memref<!tpu.dma_semaphore, #tpu.memory_space<semaphore_mem>>)
    %c5_i32 = arith.constant 5 : i32
    %88 = arith.addi %2, %c5_i32 : i32
    %89 = arith.index_cast %88 : i32 to index
    %90 = memref.load %arg2[%89] : memref<16xi32, #tpu.memory_space<smem>>
    %c8_i32_41 = arith.constant 8 : i32
    %c0_i32_42 = arith.constant 0 : i32
    %91 = arith.cmpi eq, %c8_i32_41, %c0_i32_42 : i32
    %c1_i32_43 = arith.constant 1 : i32
    %92 = arith.select %91, %c1_i32_43, %c8_i32_41 : i32
    %93 = arith.remsi %c5_i32, %92 : i32
    %c0_i32_44 = arith.constant 0 : i32
    %94 = arith.cmpi ne, %93, %c0_i32_44 : i32
    %c0_i32_45 = arith.constant 0 : i32
    %95 = arith.cmpi slt, %93, %c0_i32_45 : i32
    %c0_i32_46 = arith.constant 0 : i32
    %96 = arith.cmpi slt, %92, %c0_i32_46 : i32
    %97 = arith.xori %95, %96 : i1
    %98 = arith.andi %97, %94 : i1
    %99 = arith.addi %93, %92 : i32
    %100 = arith.select %98, %99, %93 : i32
    %c0_i32_47 = arith.constant 0 : i32
    %101 = tpu.memref_slice %arg3[%90, %c0_i32_47] : memref<64x128xf32, #tpu.memory_space<any>> -> memref<1x128xf32, #tpu.memory_space<any>>
    %c0_i32_48 = arith.constant 0 : i32
    %102 = tpu.memref_slice %arg6[%c5_i32, %c0_i32_48] : memref<8x128xf32, #tpu.memory_space<vmem>> -> memref<1x128xf32, #tpu.memory_space<vmem>>
    %103 = tpu.memref_slice %arg7[%100] : memref<8x!tpu.dma_semaphore, #tpu.memory_space<semaphore_mem>> -> memref<1x!tpu.dma_semaphore, #tpu.memory_space<semaphore_mem>>
    %104 = tpu.memref_squeeze %103 : memref<1x!tpu.dma_semaphore, #tpu.memory_space<semaphore_mem>> -> memref<!tpu.dma_semaphore, #tpu.memory_space<semaphore_mem>>
    tpu.enqueue_dma source(%101 : memref<1x128xf32, #tpu.memory_space<any>>) target(%102 : memref<1x128xf32, #tpu.memory_space<vmem>>) target_semaphore(%104 : memref<!tpu.dma_semaphore, #tpu.memory_space<semaphore_mem>>)
    %c6_i32 = arith.constant 6 : i32
    %105 = arith.addi %2, %c6_i32 : i32
    %106 = arith.index_cast %105 : i32 to index
    %107 = memref.load %arg2[%106] : memref<16xi32, #tpu.memory_space<smem>>
    %c8_i32_49 = arith.constant 8 : i32
    %c0_i32_50 = arith.constant 0 : i32
    %108 = arith.cmpi eq, %c8_i32_49, %c0_i32_50 : i32
    %c1_i32_51 = arith.constant 1 : i32
    %109 = arith.select %108, %c1_i32_51, %c8_i32_49 : i32
    %110 = arith.remsi %c6_i32, %109 : i32
    %c0_i32_52 = arith.constant 0 : i32
    %111 = arith.cmpi ne, %110, %c0_i32_52 : i32
    %c0_i32_53 = arith.constant 0 : i32
    %112 = arith.cmpi slt, %110, %c0_i32_53 : i32
    %c0_i32_54 = arith.constant 0 : i32
    %113 = arith.cmpi slt, %109, %c0_i32_54 : i32
    %114 = arith.xori %112, %113 : i1
    %115 = arith.andi %114, %111 : i1
    %116 = arith.addi %110, %109 : i32
    %117 = arith.select %115, %116, %110 : i32
    %c0_i32_55 = arith.constant 0 : i32
    %118 = tpu.memref_slice %arg3[%107, %c0_i32_55] : memref<64x128xf32, #tpu.memory_space<any>> -> memref<1x128xf32, #tpu.memory_space<any>>
    %c0_i32_56 = arith.constant 0 : i32
    %119 = tpu.memref_slice %arg6[%c6_i32, %c0_i32_56] : memref<8x128xf32, #tpu.memory_space<vmem>> -> memref<1x128xf32, #tpu.memory_space<vmem>>
    %120 = tpu.memref_slice %arg7[%117] : memref<8x!tpu.dma_semaphore, #tpu.memory_space<semaphore_mem>> -> memref<1x!tpu.dma_semaphore, #tpu.memory_space<semaphore_mem>>
    %121 = tpu.memref_squeeze %120 : memref<1x!tpu.dma_semaphore, #tpu.memory_space<semaphore_mem>> -> memref<!tpu.dma_semaphore, #tpu.memory_space<semaphore_mem>>
    tpu.enqueue_dma source(%118 : memref<1x128xf32, #tpu.memory_space<any>>) target(%119 : memref<1x128xf32, #tpu.memory_space<vmem>>) target_semaphore(%121 : memref<!tpu.dma_semaphore, #tpu.memory_space<semaphore_mem>>)
    %c7_i32 = arith.constant 7 : i32
    %122 = arith.addi %2, %c7_i32 : i32
    %123 = arith.index_cast %122 : i32 to index
    %124 = memref.load %arg2[%123] : memref<16xi32, #tpu.memory_space<smem>>
    %c8_i32_57 = arith.constant 8 : i32
    %c0_i32_58 = arith.constant 0 : i32
    %125 = arith.cmpi eq, %c8_i32_57, %c0_i32_58 : i32
    %c1_i32_59 = arith.constant 1 : i32
    %126 = arith.select %125, %c1_i32_59, %c8_i32_57 : i32
    %127 = arith.remsi %c7_i32, %126 : i32
    %c0_i32_60 = arith.constant 0 : i32
    %128 = arith.cmpi ne, %127, %c0_i32_60 : i32
    %c0_i32_61 = arith.constant 0 : i32
    %129 = arith.cmpi slt, %127, %c0_i32_61 : i32
    %c0_i32_62 = arith.constant 0 : i32
    %130 = arith.cmpi slt, %126, %c0_i32_62 : i32
    %131 = arith.xori %129, %130 : i1
    %132 = arith.andi %131, %128 : i1
    %133 = arith.addi %127, %126 : i32
    %134 = arith.select %132, %133, %127 : i32
    %c0_i32_63 = arith.constant 0 : i32
    %135 = tpu.memref_slice %arg3[%124, %c0_i32_63] : memref<64x128xf32, #tpu.memory_space<any>> -> memref<1x128xf32, #tpu.memory_space<any>>
    %c0_i32_64 = arith.constant 0 : i32
    %136 = tpu.memref_slice %arg6[%c7_i32, %c0_i32_64] : memref<8x128xf32, #tpu.memory_space<vmem>> -> memref<1x128xf32, #tpu.memory_space<vmem>>
    %137 = tpu.memref_slice %arg7[%134] : memref<8x!tpu.dma_semaphore, #tpu.memory_space<semaphore_mem>> -> memref<1x!tpu.dma_semaphore, #tpu.memory_space<semaphore_mem>>
    %138 = tpu.memref_squeeze %137 : memref<1x!tpu.dma_semaphore, #tpu.memory_space<semaphore_mem>> -> memref<!tpu.dma_semaphore, #tpu.memory_space<semaphore_mem>>
    tpu.enqueue_dma source(%135 : memref<1x128xf32, #tpu.memory_space<any>>) target(%136 : memref<1x128xf32, #tpu.memory_space<vmem>>) target_semaphore(%138 : memref<!tpu.dma_semaphore, #tpu.memory_space<semaphore_mem>>)
    %c8_i32_65 = arith.constant 8 : i32
    %c0_i32_66 = arith.constant 0 : i32
    %c8_i32_67 = arith.constant 8 : i32
    %c0_i32_68 = arith.constant 0 : i32
    %139 = arith.cmpi eq, %c8_i32_67, %c0_i32_68 : i32
    %c1_i32_69 = arith.constant 1 : i32
    %140 = arith.select %139, %c1_i32_69, %c8_i32_67 : i32
    %141 = arith.remsi %c0_i32_66, %140 : i32
    %c0_i32_70 = arith.constant 0 : i32
    %142 = arith.cmpi ne, %141, %c0_i32_70 : i32
    %c0_i32_71 = arith.constant 0 : i32
    %143 = arith.cmpi slt, %141, %c0_i32_71 : i32
    %c0_i32_72 = arith.constant 0 : i32
    %144 = arith.cmpi slt, %140, %c0_i32_72 : i32
    %145 = arith.xori %143, %144 : i1
    %146 = arith.andi %145, %142 : i1
    %147 = arith.addi %141, %140 : i32
    %148 = arith.select %146, %147, %141 : i32
    %c0_i32_73 = arith.constant 0 : i32
    %c0_i32_74 = arith.constant 0 : i32
    %149 = tpu.memref_slice %arg3[%c0_i32_73, %c0_i32_74] : memref<64x128xf32, #tpu.memory_space<any>> -> memref<1x128xf32, #tpu.memory_space<any>>
    %c0_i32_75 = arith.constant 0 : i32
    %150 = tpu.memref_slice %arg6[%c0_i32_66, %c0_i32_75] : memref<8x128xf32, #tpu.memory_space<vmem>> -> memref<1x128xf32, #tpu.memory_space<vmem>>
    %151 = tpu.memref_slice %arg7[%148] : memref<8x!tpu.dma_semaphore, #tpu.memory_space<semaphore_mem>> -> memref<1x!tpu.dma_semaphore, #tpu.memory_space<semaphore_mem>>
    %152 = tpu.memref_squeeze %151 : memref<1x!tpu.dma_semaphore, #tpu.memory_space<semaphore_mem>> -> memref<!tpu.dma_semaphore, #tpu.memory_space<semaphore_mem>>
    tpu.wait_dma2 semaphore(%152 : memref<!tpu.dma_semaphore, #tpu.memory_space<semaphore_mem>>) src(%149 : memref<1x128xf32, #tpu.memory_space<any>>) dst(%150 : memref<1x128xf32, #tpu.memory_space<vmem>>)
    %c8_i32_76 = arith.constant 8 : i32
    %153 = arith.addi %c0_i32_66, %c8_i32_76 : i32
    %c8_i32_77 = arith.constant 8 : i32
    %154 = arith.cmpi slt, %153, %c8_i32_77 : i32
    %155 = arith.extui %154 : i1 to i32
    %c0_i32_78 = arith.constant 0 : i32
    %156 = arith.cmpi ne, %155, %c0_i32_78 : i32
    scf.if %156 {
      %c8_i32_177 = arith.constant 8 : i32
      %289 = arith.addi %c0_i32_66, %c8_i32_177 : i32
      %290 = arith.addi %2, %289 : i32
      %291 = arith.index_cast %290 : i32 to index
      %292 = memref.load %arg2[%291] : memref<16xi32, #tpu.memory_space<smem>>
      %c8_i32_178 = arith.constant 8 : i32
      %c0_i32_179 = arith.constant 0 : i32
      %293 = arith.cmpi eq, %c8_i32_178, %c0_i32_179 : i32
      %c1_i32_180 = arith.constant 1 : i32
      %294 = arith.select %293, %c1_i32_180, %c8_i32_178 : i32
      %295 = arith.remsi %289, %294 : i32
      %c0_i32_181 = arith.constant 0 : i32
      %296 = arith.cmpi ne, %295, %c0_i32_181 : i32
      %c0_i32_182 = arith.constant 0 : i32
      %297 = arith.cmpi slt, %295, %c0_i32_182 : i32
      %c0_i32_183 = arith.constant 0 : i32
      %298 = arith.cmpi slt, %294, %c0_i32_183 : i32
      %299 = arith.xori %297, %298 : i1
      %300 = arith.andi %299, %296 : i1
      %301 = arith.addi %295, %294 : i32
      %302 = arith.select %300, %301, %295 : i32
      %c0_i32_184 = arith.constant 0 : i32
      %303 = tpu.memref_slice %arg3[%292, %c0_i32_184] : memref<64x128xf32, #tpu.memory_space<any>> -> memref<1x128xf32, #tpu.memory_space<any>>
      %c0_i32_185 = arith.constant 0 : i32
      %304 = tpu.memref_slice %arg6[%289, %c0_i32_185] : memref<8x128xf32, #tpu.memory_space<vmem>> -> memref<1x128xf32, #tpu.memory_space<vmem>>
      %305 = tpu.memref_slice %arg7[%302] : memref<8x!tpu.dma_semaphore, #tpu.memory_space<semaphore_mem>> -> memref<1x!tpu.dma_semaphore, #tpu.memory_space<semaphore_mem>>
      %306 = tpu.memref_squeeze %305 : memref<1x!tpu.dma_semaphore, #tpu.memory_space<semaphore_mem>> -> memref<!tpu.dma_semaphore, #tpu.memory_space<semaphore_mem>>
      tpu.enqueue_dma source(%303 : memref<1x128xf32, #tpu.memory_space<any>>) target(%304 : memref<1x128xf32, #tpu.memory_space<vmem>>) target_semaphore(%306 : memref<!tpu.dma_semaphore, #tpu.memory_space<semaphore_mem>>)
    } else {
    }
    %c1_i32_79 = arith.constant 1 : i32
    %c8_i32_80 = arith.constant 8 : i32
    %c0_i32_81 = arith.constant 0 : i32
    %157 = arith.cmpi eq, %c8_i32_80, %c0_i32_81 : i32
    %c1_i32_82 = arith.constant 1 : i32
    %158 = arith.select %157, %c1_i32_82, %c8_i32_80 : i32
    %159 = arith.remsi %c1_i32_79, %158 : i32
    %c0_i32_83 = arith.constant 0 : i32
    %160 = arith.cmpi ne, %159, %c0_i32_83 : i32
    %c0_i32_84 = arith.constant 0 : i32
    %161 = arith.cmpi slt, %159, %c0_i32_84 : i32
    %c0_i32_85 = arith.constant 0 : i32
    %162 = arith.cmpi slt, %158, %c0_i32_85 : i32
    %163 = arith.xori %161, %162 : i1
    %164 = arith.andi %163, %160 : i1
    %165 = arith.addi %159, %158 : i32
    %166 = arith.select %164, %165, %159 : i32
    %c0_i32_86 = arith.constant 0 : i32
    %c0_i32_87 = arith.constant 0 : i32
    %167 = tpu.memref_slice %arg3[%c0_i32_86, %c0_i32_87] : memref<64x128xf32, #tpu.memory_space<any>> -> memref<1x128xf32, #tpu.memory_space<any>>
    %c0_i32_88 = arith.constant 0 : i32
    %168 = tpu.memref_slice %arg6[%c1_i32_79, %c0_i32_88] : memref<8x128xf32, #tpu.memory_space<vmem>> -> memref<1x128xf32, #tpu.memory_space<vmem>>
    %169 = tpu.memref_slice %arg7[%166] : memref<8x!tpu.dma_semaphore, #tpu.memory_space<semaphore_mem>> -> memref<1x!tpu.dma_semaphore, #tpu.memory_space<semaphore_mem>>
    %170 = tpu.memref_squeeze %169 : memref<1x!tpu.dma_semaphore, #tpu.memory_space<semaphore_mem>> -> memref<!tpu.dma_semaphore, #tpu.memory_space<semaphore_mem>>
    tpu.wait_dma2 semaphore(%170 : memref<!tpu.dma_semaphore, #tpu.memory_space<semaphore_mem>>) src(%167 : memref<1x128xf32, #tpu.memory_space<any>>) dst(%168 : memref<1x128xf32, #tpu.memory_space<vmem>>)
    %c8_i32_89 = arith.constant 8 : i32
    %171 = arith.addi %c1_i32_79, %c8_i32_89 : i32
    %c8_i32_90 = arith.constant 8 : i32
    %172 = arith.cmpi slt, %171, %c8_i32_90 : i32
    %173 = arith.extui %172 : i1 to i32
    %c0_i32_91 = arith.constant 0 : i32
    %174 = arith.cmpi ne, %173, %c0_i32_91 : i32
    scf.if %174 {
      %c8_i32_177 = arith.constant 8 : i32
      %289 = arith.addi %c1_i32_79, %c8_i32_177 : i32
      %290 = arith.addi %2, %289 : i32
      %291 = arith.index_cast %290 : i32 to index
      %292 = memref.load %arg2[%291] : memref<16xi32, #tpu.memory_space<smem>>
      %c8_i32_178 = arith.constant 8 : i32
      %c0_i32_179 = arith.constant 0 : i32
      %293 = arith.cmpi eq, %c8_i32_178, %c0_i32_179 : i32
      %c1_i32_180 = arith.constant 1 : i32
      %294 = arith.select %293, %c1_i32_180, %c8_i32_178 : i32
      %295 = arith.remsi %289, %294 : i32
      %c0_i32_181 = arith.constant 0 : i32
      %296 = arith.cmpi ne, %295, %c0_i32_181 : i32
      %c0_i32_182 = arith.constant 0 : i32
      %297 = arith.cmpi slt, %295, %c0_i32_182 : i32
      %c0_i32_183 = arith.constant 0 : i32
      %298 = arith.cmpi slt, %294, %c0_i32_183 : i32
      %299 = arith.xori %297, %298 : i1
      %300 = arith.andi %299, %296 : i1
      %301 = arith.addi %295, %294 : i32
      %302 = arith.select %300, %301, %295 : i32
      %c0_i32_184 = arith.constant 0 : i32
      %303 = tpu.memref_slice %arg3[%292, %c0_i32_184] : memref<64x128xf32, #tpu.memory_space<any>> -> memref<1x128xf32, #tpu.memory_space<any>>
      %c0_i32_185 = arith.constant 0 : i32
      %304 = tpu.memref_slice %arg6[%289, %c0_i32_185] : memref<8x128xf32, #tpu.memory_space<vmem>> -> memref<1x128xf32, #tpu.memory_space<vmem>>
      %305 = tpu.memref_slice %arg7[%302] : memref<8x!tpu.dma_semaphore, #tpu.memory_space<semaphore_mem>> -> memref<1x!tpu.dma_semaphore, #tpu.memory_space<semaphore_mem>>
      %306 = tpu.memref_squeeze %305 : memref<1x!tpu.dma_semaphore, #tpu.memory_space<semaphore_mem>> -> memref<!tpu.dma_semaphore, #tpu.memory_space<semaphore_mem>>
      tpu.enqueue_dma source(%303 : memref<1x128xf32, #tpu.memory_space<any>>) target(%304 : memref<1x128xf32, #tpu.memory_space<vmem>>) target_semaphore(%306 : memref<!tpu.dma_semaphore, #tpu.memory_space<semaphore_mem>>)
    } else {
    }
    %c2_i32_92 = arith.constant 2 : i32
    %c8_i32_93 = arith.constant 8 : i32
    %c0_i32_94 = arith.constant 0 : i32
    %175 = arith.cmpi eq, %c8_i32_93, %c0_i32_94 : i32
    %c1_i32_95 = arith.constant 1 : i32
    %176 = arith.select %175, %c1_i32_95, %c8_i32_93 : i32
    %177 = arith.remsi %c2_i32_92, %176 : i32
    %c0_i32_96 = arith.constant 0 : i32
    %178 = arith.cmpi ne, %177, %c0_i32_96 : i32
    %c0_i32_97 = arith.constant 0 : i32
    %179 = arith.cmpi slt, %177, %c0_i32_97 : i32
    %c0_i32_98 = arith.constant 0 : i32
    %180 = arith.cmpi slt, %176, %c0_i32_98 : i32
    %181 = arith.xori %179, %180 : i1
    %182 = arith.andi %181, %178 : i1
    %183 = arith.addi %177, %176 : i32
    %184 = arith.select %182, %183, %177 : i32
    %c0_i32_99 = arith.constant 0 : i32
    %c0_i32_100 = arith.constant 0 : i32
    %185 = tpu.memref_slice %arg3[%c0_i32_99, %c0_i32_100] : memref<64x128xf32, #tpu.memory_space<any>> -> memref<1x128xf32, #tpu.memory_space<any>>
    %c0_i32_101 = arith.constant 0 : i32
    %186 = tpu.memref_slice %arg6[%c2_i32_92, %c0_i32_101] : memref<8x128xf32, #tpu.memory_space<vmem>> -> memref<1x128xf32, #tpu.memory_space<vmem>>
    %187 = tpu.memref_slice %arg7[%184] : memref<8x!tpu.dma_semaphore, #tpu.memory_space<semaphore_mem>> -> memref<1x!tpu.dma_semaphore, #tpu.memory_space<semaphore_mem>>
    %188 = tpu.memref_squeeze %187 : memref<1x!tpu.dma_semaphore, #tpu.memory_space<semaphore_mem>> -> memref<!tpu.dma_semaphore, #tpu.memory_space<semaphore_mem>>
    tpu.wait_dma2 semaphore(%188 : memref<!tpu.dma_semaphore, #tpu.memory_space<semaphore_mem>>) src(%185 : memref<1x128xf32, #tpu.memory_space<any>>) dst(%186 : memref<1x128xf32, #tpu.memory_space<vmem>>)
    %c8_i32_102 = arith.constant 8 : i32
    %189 = arith.addi %c2_i32_92, %c8_i32_102 : i32
    %c8_i32_103 = arith.constant 8 : i32
    %190 = arith.cmpi slt, %189, %c8_i32_103 : i32
    %191 = arith.extui %190 : i1 to i32
    %c0_i32_104 = arith.constant 0 : i32
    %192 = arith.cmpi ne, %191, %c0_i32_104 : i32
    scf.if %192 {
      %c8_i32_177 = arith.constant 8 : i32
      %289 = arith.addi %c2_i32_92, %c8_i32_177 : i32
      %290 = arith.addi %2, %289 : i32
      %291 = arith.index_cast %290 : i32 to index
      %292 = memref.load %arg2[%291] : memref<16xi32, #tpu.memory_space<smem>>
      %c8_i32_178 = arith.constant 8 : i32
      %c0_i32_179 = arith.constant 0 : i32
      %293 = arith.cmpi eq, %c8_i32_178, %c0_i32_179 : i32
      %c1_i32_180 = arith.constant 1 : i32
      %294 = arith.select %293, %c1_i32_180, %c8_i32_178 : i32
      %295 = arith.remsi %289, %294 : i32
      %c0_i32_181 = arith.constant 0 : i32
      %296 = arith.cmpi ne, %295, %c0_i32_181 : i32
      %c0_i32_182 = arith.constant 0 : i32
      %297 = arith.cmpi slt, %295, %c0_i32_182 : i32
      %c0_i32_183 = arith.constant 0 : i32
      %298 = arith.cmpi slt, %294, %c0_i32_183 : i32
      %299 = arith.xori %297, %298 : i1
      %300 = arith.andi %299, %296 : i1
      %301 = arith.addi %295, %294 : i32
      %302 = arith.select %300, %301, %295 : i32
      %c0_i32_184 = arith.constant 0 : i32
      %303 = tpu.memref_slice %arg3[%292, %c0_i32_184] : memref<64x128xf32, #tpu.memory_space<any>> -> memref<1x128xf32, #tpu.memory_space<any>>
      %c0_i32_185 = arith.constant 0 : i32
      %304 = tpu.memref_slice %arg6[%289, %c0_i32_185] : memref<8x128xf32, #tpu.memory_space<vmem>> -> memref<1x128xf32, #tpu.memory_space<vmem>>
      %305 = tpu.memref_slice %arg7[%302] : memref<8x!tpu.dma_semaphore, #tpu.memory_space<semaphore_mem>> -> memref<1x!tpu.dma_semaphore, #tpu.memory_space<semaphore_mem>>
      %306 = tpu.memref_squeeze %305 : memref<1x!tpu.dma_semaphore, #tpu.memory_space<semaphore_mem>> -> memref<!tpu.dma_semaphore, #tpu.memory_space<semaphore_mem>>
      tpu.enqueue_dma source(%303 : memref<1x128xf32, #tpu.memory_space<any>>) target(%304 : memref<1x128xf32, #tpu.memory_space<vmem>>) target_semaphore(%306 : memref<!tpu.dma_semaphore, #tpu.memory_space<semaphore_mem>>)
    } else {
    }
    %c3_i32_105 = arith.constant 3 : i32
    %c8_i32_106 = arith.constant 8 : i32
    %c0_i32_107 = arith.constant 0 : i32
    %193 = arith.cmpi eq, %c8_i32_106, %c0_i32_107 : i32
    %c1_i32_108 = arith.constant 1 : i32
    %194 = arith.select %193, %c1_i32_108, %c8_i32_106 : i32
    %195 = arith.remsi %c3_i32_105, %194 : i32
    %c0_i32_109 = arith.constant 0 : i32
    %196 = arith.cmpi ne, %195, %c0_i32_109 : i32
    %c0_i32_110 = arith.constant 0 : i32
    %197 = arith.cmpi slt, %195, %c0_i32_110 : i32
    %c0_i32_111 = arith.constant 0 : i32
    %198 = arith.cmpi slt, %194, %c0_i32_111 : i32
    %199 = arith.xori %197, %198 : i1
    %200 = arith.andi %199, %196 : i1
    %201 = arith.addi %195, %194 : i32
    %202 = arith.select %200, %201, %195 : i32
    %c0_i32_112 = arith.constant 0 : i32
    %c0_i32_113 = arith.constant 0 : i32
    %203 = tpu.memref_slice %arg3[%c0_i32_112, %c0_i32_113] : memref<64x128xf32, #tpu.memory_space<any>> -> memref<1x128xf32, #tpu.memory_space<any>>
    %c0_i32_114 = arith.constant 0 : i32
    %204 = tpu.memref_slice %arg6[%c3_i32_105, %c0_i32_114] : memref<8x128xf32, #tpu.memory_space<vmem>> -> memref<1x128xf32, #tpu.memory_space<vmem>>
    %205 = tpu.memref_slice %arg7[%202] : memref<8x!tpu.dma_semaphore, #tpu.memory_space<semaphore_mem>> -> memref<1x!tpu.dma_semaphore, #tpu.memory_space<semaphore_mem>>
    %206 = tpu.memref_squeeze %205 : memref<1x!tpu.dma_semaphore, #tpu.memory_space<semaphore_mem>> -> memref<!tpu.dma_semaphore, #tpu.memory_space<semaphore_mem>>
    tpu.wait_dma2 semaphore(%206 : memref<!tpu.dma_semaphore, #tpu.memory_space<semaphore_mem>>) src(%203 : memref<1x128xf32, #tpu.memory_space<any>>) dst(%204 : memref<1x128xf32, #tpu.memory_space<vmem>>)
    %c8_i32_115 = arith.constant 8 : i32
    %207 = arith.addi %c3_i32_105, %c8_i32_115 : i32
    %c8_i32_116 = arith.constant 8 : i32
    %208 = arith.cmpi slt, %207, %c8_i32_116 : i32
    %209 = arith.extui %208 : i1 to i32
    %c0_i32_117 = arith.constant 0 : i32
    %210 = arith.cmpi ne, %209, %c0_i32_117 : i32
    scf.if %210 {
      %c8_i32_177 = arith.constant 8 : i32
      %289 = arith.addi %c3_i32_105, %c8_i32_177 : i32
      %290 = arith.addi %2, %289 : i32
      %291 = arith.index_cast %290 : i32 to index
      %292 = memref.load %arg2[%291] : memref<16xi32, #tpu.memory_space<smem>>
      %c8_i32_178 = arith.constant 8 : i32
      %c0_i32_179 = arith.constant 0 : i32
      %293 = arith.cmpi eq, %c8_i32_178, %c0_i32_179 : i32
      %c1_i32_180 = arith.constant 1 : i32
      %294 = arith.select %293, %c1_i32_180, %c8_i32_178 : i32
      %295 = arith.remsi %289, %294 : i32
      %c0_i32_181 = arith.constant 0 : i32
      %296 = arith.cmpi ne, %295, %c0_i32_181 : i32
      %c0_i32_182 = arith.constant 0 : i32
      %297 = arith.cmpi slt, %295, %c0_i32_182 : i32
      %c0_i32_183 = arith.constant 0 : i32
      %298 = arith.cmpi slt, %294, %c0_i32_183 : i32
      %299 = arith.xori %297, %298 : i1
      %300 = arith.andi %299, %296 : i1
      %301 = arith.addi %295, %294 : i32
      %302 = arith.select %300, %301, %295 : i32
      %c0_i32_184 = arith.constant 0 : i32
      %303 = tpu.memref_slice %arg3[%292, %c0_i32_184] : memref<64x128xf32, #tpu.memory_space<any>> -> memref<1x128xf32, #tpu.memory_space<any>>
      %c0_i32_185 = arith.constant 0 : i32
      %304 = tpu.memref_slice %arg6[%289, %c0_i32_185] : memref<8x128xf32, #tpu.memory_space<vmem>> -> memref<1x128xf32, #tpu.memory_space<vmem>>
      %305 = tpu.memref_slice %arg7[%302] : memref<8x!tpu.dma_semaphore, #tpu.memory_space<semaphore_mem>> -> memref<1x!tpu.dma_semaphore, #tpu.memory_space<semaphore_mem>>
      %306 = tpu.memref_squeeze %305 : memref<1x!tpu.dma_semaphore, #tpu.memory_space<semaphore_mem>> -> memref<!tpu.dma_semaphore, #tpu.memory_space<semaphore_mem>>
      tpu.enqueue_dma source(%303 : memref<1x128xf32, #tpu.memory_space<any>>) target(%304 : memref<1x128xf32, #tpu.memory_space<vmem>>) target_semaphore(%306 : memref<!tpu.dma_semaphore, #tpu.memory_space<semaphore_mem>>)
    } else {
    }
    %c4_i32_118 = arith.constant 4 : i32
    %c8_i32_119 = arith.constant 8 : i32
    %c0_i32_120 = arith.constant 0 : i32
    %211 = arith.cmpi eq, %c8_i32_119, %c0_i32_120 : i32
    %c1_i32_121 = arith.constant 1 : i32
    %212 = arith.select %211, %c1_i32_121, %c8_i32_119 : i32
    %213 = arith.remsi %c4_i32_118, %212 : i32
    %c0_i32_122 = arith.constant 0 : i32
    %214 = arith.cmpi ne, %213, %c0_i32_122 : i32
    %c0_i32_123 = arith.constant 0 : i32
    %215 = arith.cmpi slt, %213, %c0_i32_123 : i32
    %c0_i32_124 = arith.constant 0 : i32
    %216 = arith.cmpi slt, %212, %c0_i32_124 : i32
    %217 = arith.xori %215, %216 : i1
    %218 = arith.andi %217, %214 : i1
    %219 = arith.addi %213, %212 : i32
    %220 = arith.select %218, %219, %213 : i32
    %c0_i32_125 = arith.constant 0 : i32
    %c0_i32_126 = arith.constant 0 : i32
    %221 = tpu.memref_slice %arg3[%c0_i32_125, %c0_i32_126] : memref<64x128xf32, #tpu.memory_space<any>> -> memref<1x128xf32, #tpu.memory_space<any>>
    %c0_i32_127 = arith.constant 0 : i32
    %222 = tpu.memref_slice %arg6[%c4_i32_118, %c0_i32_127] : memref<8x128xf32, #tpu.memory_space<vmem>> -> memref<1x128xf32, #tpu.memory_space<vmem>>
    %223 = tpu.memref_slice %arg7[%220] : memref<8x!tpu.dma_semaphore, #tpu.memory_space<semaphore_mem>> -> memref<1x!tpu.dma_semaphore, #tpu.memory_space<semaphore_mem>>
    %224 = tpu.memref_squeeze %223 : memref<1x!tpu.dma_semaphore, #tpu.memory_space<semaphore_mem>> -> memref<!tpu.dma_semaphore, #tpu.memory_space<semaphore_mem>>
    tpu.wait_dma2 semaphore(%224 : memref<!tpu.dma_semaphore, #tpu.memory_space<semaphore_mem>>) src(%221 : memref<1x128xf32, #tpu.memory_space<any>>) dst(%222 : memref<1x128xf32, #tpu.memory_space<vmem>>)
    %c8_i32_128 = arith.constant 8 : i32
    %225 = arith.addi %c4_i32_118, %c8_i32_128 : i32
    %c8_i32_129 = arith.constant 8 : i32
    %226 = arith.cmpi slt, %225, %c8_i32_129 : i32
    %227 = arith.extui %226 : i1 to i32
    %c0_i32_130 = arith.constant 0 : i32
    %228 = arith.cmpi ne, %227, %c0_i32_130 : i32
    scf.if %228 {
      %c8_i32_177 = arith.constant 8 : i32
      %289 = arith.addi %c4_i32_118, %c8_i32_177 : i32
      %290 = arith.addi %2, %289 : i32
      %291 = arith.index_cast %290 : i32 to index
      %292 = memref.load %arg2[%291] : memref<16xi32, #tpu.memory_space<smem>>
      %c8_i32_178 = arith.constant 8 : i32
      %c0_i32_179 = arith.constant 0 : i32
      %293 = arith.cmpi eq, %c8_i32_178, %c0_i32_179 : i32
      %c1_i32_180 = arith.constant 1 : i32
      %294 = arith.select %293, %c1_i32_180, %c8_i32_178 : i32
      %295 = arith.remsi %289, %294 : i32
      %c0_i32_181 = arith.constant 0 : i32
      %296 = arith.cmpi ne, %295, %c0_i32_181 : i32
      %c0_i32_182 = arith.constant 0 : i32
      %297 = arith.cmpi slt, %295, %c0_i32_182 : i32
      %c0_i32_183 = arith.constant 0 : i32
      %298 = arith.cmpi slt, %294, %c0_i32_183 : i32
      %299 = arith.xori %297, %298 : i1
      %300 = arith.andi %299, %296 : i1
      %301 = arith.addi %295, %294 : i32
      %302 = arith.select %300, %301, %295 : i32
      %c0_i32_184 = arith.constant 0 : i32
      %303 = tpu.memref_slice %arg3[%292, %c0_i32_184] : memref<64x128xf32, #tpu.memory_space<any>> -> memref<1x128xf32, #tpu.memory_space<any>>
      %c0_i32_185 = arith.constant 0 : i32
      %304 = tpu.memref_slice %arg6[%289, %c0_i32_185] : memref<8x128xf32, #tpu.memory_space<vmem>> -> memref<1x128xf32, #tpu.memory_space<vmem>>
      %305 = tpu.memref_slice %arg7[%302] : memref<8x!tpu.dma_semaphore, #tpu.memory_space<semaphore_mem>> -> memref<1x!tpu.dma_semaphore, #tpu.memory_space<semaphore_mem>>
      %306 = tpu.memref_squeeze %305 : memref<1x!tpu.dma_semaphore, #tpu.memory_space<semaphore_mem>> -> memref<!tpu.dma_semaphore, #tpu.memory_space<semaphore_mem>>
      tpu.enqueue_dma source(%303 : memref<1x128xf32, #tpu.memory_space<any>>) target(%304 : memref<1x128xf32, #tpu.memory_space<vmem>>) target_semaphore(%306 : memref<!tpu.dma_semaphore, #tpu.memory_space<semaphore_mem>>)
    } else {
    }
    %c5_i32_131 = arith.constant 5 : i32
    %c8_i32_132 = arith.constant 8 : i32
    %c0_i32_133 = arith.constant 0 : i32
    %229 = arith.cmpi eq, %c8_i32_132, %c0_i32_133 : i32
    %c1_i32_134 = arith.constant 1 : i32
    %230 = arith.select %229, %c1_i32_134, %c8_i32_132 : i32
    %231 = arith.remsi %c5_i32_131, %230 : i32
    %c0_i32_135 = arith.constant 0 : i32
    %232 = arith.cmpi ne, %231, %c0_i32_135 : i32
    %c0_i32_136 = arith.constant 0 : i32
    %233 = arith.cmpi slt, %231, %c0_i32_136 : i32
    %c0_i32_137 = arith.constant 0 : i32
    %234 = arith.cmpi slt, %230, %c0_i32_137 : i32
    %235 = arith.xori %233, %234 : i1
    %236 = arith.andi %235, %232 : i1
    %237 = arith.addi %231, %230 : i32
    %238 = arith.select %236, %237, %231 : i32
    %c0_i32_138 = arith.constant 0 : i32
    %c0_i32_139 = arith.constant 0 : i32
    %239 = tpu.memref_slice %arg3[%c0_i32_138, %c0_i32_139] : memref<64x128xf32, #tpu.memory_space<any>> -> memref<1x128xf32, #tpu.memory_space<any>>
    %c0_i32_140 = arith.constant 0 : i32
    %240 = tpu.memref_slice %arg6[%c5_i32_131, %c0_i32_140] : memref<8x128xf32, #tpu.memory_space<vmem>> -> memref<1x128xf32, #tpu.memory_space<vmem>>
    %241 = tpu.memref_slice %arg7[%238] : memref<8x!tpu.dma_semaphore, #tpu.memory_space<semaphore_mem>> -> memref<1x!tpu.dma_semaphore, #tpu.memory_space<semaphore_mem>>
    %242 = tpu.memref_squeeze %241 : memref<1x!tpu.dma_semaphore, #tpu.memory_space<semaphore_mem>> -> memref<!tpu.dma_semaphore, #tpu.memory_space<semaphore_mem>>
    tpu.wait_dma2 semaphore(%242 : memref<!tpu.dma_semaphore, #tpu.memory_space<semaphore_mem>>) src(%239 : memref<1x128xf32, #tpu.memory_space<any>>) dst(%240 : memref<1x128xf32, #tpu.memory_space<vmem>>)
    %c8_i32_141 = arith.constant 8 : i32
    %243 = arith.addi %c5_i32_131, %c8_i32_141 : i32
    %c8_i32_142 = arith.constant 8 : i32
    %244 = arith.cmpi slt, %243, %c8_i32_142 : i32
    %245 = arith.extui %244 : i1 to i32
    %c0_i32_143 = arith.constant 0 : i32
    %246 = arith.cmpi ne, %245, %c0_i32_143 : i32
    scf.if %246 {
      %c8_i32_177 = arith.constant 8 : i32
      %289 = arith.addi %c5_i32_131, %c8_i32_177 : i32
      %290 = arith.addi %2, %289 : i32
      %291 = arith.index_cast %290 : i32 to index
      %292 = memref.load %arg2[%291] : memref<16xi32, #tpu.memory_space<smem>>
      %c8_i32_178 = arith.constant 8 : i32
      %c0_i32_179 = arith.constant 0 : i32
      %293 = arith.cmpi eq, %c8_i32_178, %c0_i32_179 : i32
      %c1_i32_180 = arith.constant 1 : i32
      %294 = arith.select %293, %c1_i32_180, %c8_i32_178 : i32
      %295 = arith.remsi %289, %294 : i32
      %c0_i32_181 = arith.constant 0 : i32
      %296 = arith.cmpi ne, %295, %c0_i32_181 : i32
      %c0_i32_182 = arith.constant 0 : i32
      %297 = arith.cmpi slt, %295, %c0_i32_182 : i32
      %c0_i32_183 = arith.constant 0 : i32
      %298 = arith.cmpi slt, %294, %c0_i32_183 : i32
      %299 = arith.xori %297, %298 : i1
      %300 = arith.andi %299, %296 : i1
      %301 = arith.addi %295, %294 : i32
      %302 = arith.select %300, %301, %295 : i32
      %c0_i32_184 = arith.constant 0 : i32
      %303 = tpu.memref_slice %arg3[%292, %c0_i32_184] : memref<64x128xf32, #tpu.memory_space<any>> -> memref<1x128xf32, #tpu.memory_space<any>>
      %c0_i32_185 = arith.constant 0 : i32
      %304 = tpu.memref_slice %arg6[%289, %c0_i32_185] : memref<8x128xf32, #tpu.memory_space<vmem>> -> memref<1x128xf32, #tpu.memory_space<vmem>>
      %305 = tpu.memref_slice %arg7[%302] : memref<8x!tpu.dma_semaphore, #tpu.memory_space<semaphore_mem>> -> memref<1x!tpu.dma_semaphore, #tpu.memory_space<semaphore_mem>>
      %306 = tpu.memref_squeeze %305 : memref<1x!tpu.dma_semaphore, #tpu.memory_space<semaphore_mem>> -> memref<!tpu.dma_semaphore, #tpu.memory_space<semaphore_mem>>
      tpu.enqueue_dma source(%303 : memref<1x128xf32, #tpu.memory_space<any>>) target(%304 : memref<1x128xf32, #tpu.memory_space<vmem>>) target_semaphore(%306 : memref<!tpu.dma_semaphore, #tpu.memory_space<semaphore_mem>>)
    } else {
    }
    %c6_i32_144 = arith.constant 6 : i32
    %c8_i32_145 = arith.constant 8 : i32
    %c0_i32_146 = arith.constant 0 : i32
    %247 = arith.cmpi eq, %c8_i32_145, %c0_i32_146 : i32
    %c1_i32_147 = arith.constant 1 : i32
    %248 = arith.select %247, %c1_i32_147, %c8_i32_145 : i32
    %249 = arith.remsi %c6_i32_144, %248 : i32
    %c0_i32_148 = arith.constant 0 : i32
    %250 = arith.cmpi ne, %249, %c0_i32_148 : i32
    %c0_i32_149 = arith.constant 0 : i32
    %251 = arith.cmpi slt, %249, %c0_i32_149 : i32
    %c0_i32_150 = arith.constant 0 : i32
    %252 = arith.cmpi slt, %248, %c0_i32_150 : i32
    %253 = arith.xori %251, %252 : i1
    %254 = arith.andi %253, %250 : i1
    %255 = arith.addi %249, %248 : i32
    %256 = arith.select %254, %255, %249 : i32
    %c0_i32_151 = arith.constant 0 : i32
    %c0_i32_152 = arith.constant 0 : i32
    %257 = tpu.memref_slice %arg3[%c0_i32_151, %c0_i32_152] : memref<64x128xf32, #tpu.memory_space<any>> -> memref<1x128xf32, #tpu.memory_space<any>>
    %c0_i32_153 = arith.constant 0 : i32
    %258 = tpu.memref_slice %arg6[%c6_i32_144, %c0_i32_153] : memref<8x128xf32, #tpu.memory_space<vmem>> -> memref<1x128xf32, #tpu.memory_space<vmem>>
    %259 = tpu.memref_slice %arg7[%256] : memref<8x!tpu.dma_semaphore, #tpu.memory_space<semaphore_mem>> -> memref<1x!tpu.dma_semaphore, #tpu.memory_space<semaphore_mem>>
    %260 = tpu.memref_squeeze %259 : memref<1x!tpu.dma_semaphore, #tpu.memory_space<semaphore_mem>> -> memref<!tpu.dma_semaphore, #tpu.memory_space<semaphore_mem>>
    tpu.wait_dma2 semaphore(%260 : memref<!tpu.dma_semaphore, #tpu.memory_space<semaphore_mem>>) src(%257 : memref<1x128xf32, #tpu.memory_space<any>>) dst(%258 : memref<1x128xf32, #tpu.memory_space<vmem>>)
    %c8_i32_154 = arith.constant 8 : i32
    %261 = arith.addi %c6_i32_144, %c8_i32_154 : i32
    %c8_i32_155 = arith.constant 8 : i32
    %262 = arith.cmpi slt, %261, %c8_i32_155 : i32
    %263 = arith.extui %262 : i1 to i32
    %c0_i32_156 = arith.constant 0 : i32
    %264 = arith.cmpi ne, %263, %c0_i32_156 : i32
    scf.if %264 {
      %c8_i32_177 = arith.constant 8 : i32
      %289 = arith.addi %c6_i32_144, %c8_i32_177 : i32
      %290 = arith.addi %2, %289 : i32
      %291 = arith.index_cast %290 : i32 to index
      %292 = memref.load %arg2[%291] : memref<16xi32, #tpu.memory_space<smem>>
      %c8_i32_178 = arith.constant 8 : i32
      %c0_i32_179 = arith.constant 0 : i32
      %293 = arith.cmpi eq, %c8_i32_178, %c0_i32_179 : i32
      %c1_i32_180 = arith.constant 1 : i32
      %294 = arith.select %293, %c1_i32_180, %c8_i32_178 : i32
      %295 = arith.remsi %289, %294 : i32
      %c0_i32_181 = arith.constant 0 : i32
      %296 = arith.cmpi ne, %295, %c0_i32_181 : i32
      %c0_i32_182 = arith.constant 0 : i32
      %297 = arith.cmpi slt, %295, %c0_i32_182 : i32
      %c0_i32_183 = arith.constant 0 : i32
      %298 = arith.cmpi slt, %294, %c0_i32_183 : i32
      %299 = arith.xori %297, %298 : i1
      %300 = arith.andi %299, %296 : i1
      %301 = arith.addi %295, %294 : i32
      %302 = arith.select %300, %301, %295 : i32
      %c0_i32_184 = arith.constant 0 : i32
      %303 = tpu.memref_slice %arg3[%292, %c0_i32_184] : memref<64x128xf32, #tpu.memory_space<any>> -> memref<1x128xf32, #tpu.memory_space<any>>
      %c0_i32_185 = arith.constant 0 : i32
      %304 = tpu.memref_slice %arg6[%289, %c0_i32_185] : memref<8x128xf32, #tpu.memory_space<vmem>> -> memref<1x128xf32, #tpu.memory_space<vmem>>
      %305 = tpu.memref_slice %arg7[%302] : memref<8x!tpu.dma_semaphore, #tpu.memory_space<semaphore_mem>> -> memref<1x!tpu.dma_semaphore, #tpu.memory_space<semaphore_mem>>
      %306 = tpu.memref_squeeze %305 : memref<1x!tpu.dma_semaphore, #tpu.memory_space<semaphore_mem>> -> memref<!tpu.dma_semaphore, #tpu.memory_space<semaphore_mem>>
      tpu.enqueue_dma source(%303 : memref<1x128xf32, #tpu.memory_space<any>>) target(%304 : memref<1x128xf32, #tpu.memory_space<vmem>>) target_semaphore(%306 : memref<!tpu.dma_semaphore, #tpu.memory_space<semaphore_mem>>)
    } else {
    }
    %c7_i32_157 = arith.constant 7 : i32
    %c8_i32_158 = arith.constant 8 : i32
    %c0_i32_159 = arith.constant 0 : i32
    %265 = arith.cmpi eq, %c8_i32_158, %c0_i32_159 : i32
    %c1_i32_160 = arith.constant 1 : i32
    %266 = arith.select %265, %c1_i32_160, %c8_i32_158 : i32
    %267 = arith.remsi %c7_i32_157, %266 : i32
    %c0_i32_161 = arith.constant 0 : i32
    %268 = arith.cmpi ne, %267, %c0_i32_161 : i32
    %c0_i32_162 = arith.constant 0 : i32
    %269 = arith.cmpi slt, %267, %c0_i32_162 : i32
    %c0_i32_163 = arith.constant 0 : i32
    %270 = arith.cmpi slt, %266, %c0_i32_163 : i32
    %271 = arith.xori %269, %270 : i1
    %272 = arith.andi %271, %268 : i1
    %273 = arith.addi %267, %266 : i32
    %274 = arith.select %272, %273, %267 : i32
    %c0_i32_164 = arith.constant 0 : i32
    %c0_i32_165 = arith.constant 0 : i32
    %275 = tpu.memref_slice %arg3[%c0_i32_164, %c0_i32_165] : memref<64x128xf32, #tpu.memory_space<any>> -> memref<1x128xf32, #tpu.memory_space<any>>
    %c0_i32_166 = arith.constant 0 : i32
    %276 = tpu.memref_slice %arg6[%c7_i32_157, %c0_i32_166] : memref<8x128xf32, #tpu.memory_space<vmem>> -> memref<1x128xf32, #tpu.memory_space<vmem>>
    %277 = tpu.memref_slice %arg7[%274] : memref<8x!tpu.dma_semaphore, #tpu.memory_space<semaphore_mem>> -> memref<1x!tpu.dma_semaphore, #tpu.memory_space<semaphore_mem>>
    %278 = tpu.memref_squeeze %277 : memref<1x!tpu.dma_semaphore, #tpu.memory_space<semaphore_mem>> -> memref<!tpu.dma_semaphore, #tpu.memory_space<semaphore_mem>>
    tpu.wait_dma2 semaphore(%278 : memref<!tpu.dma_semaphore, #tpu.memory_space<semaphore_mem>>) src(%275 : memref<1x128xf32, #tpu.memory_space<any>>) dst(%276 : memref<1x128xf32, #tpu.memory_space<vmem>>)
    %c8_i32_167 = arith.constant 8 : i32
    %279 = arith.addi %c7_i32_157, %c8_i32_167 : i32
    %c8_i32_168 = arith.constant 8 : i32
    %280 = arith.cmpi slt, %279, %c8_i32_168 : i32
    %281 = arith.extui %280 : i1 to i32
    %c0_i32_169 = arith.constant 0 : i32
    %282 = arith.cmpi ne, %281, %c0_i32_169 : i32
    scf.if %282 {
      %c8_i32_177 = arith.constant 8 : i32
      %289 = arith.addi %c7_i32_157, %c8_i32_177 : i32
      %290 = arith.addi %2, %289 : i32
      %291 = arith.index_cast %290 : i32 to index
      %292 = memref.load %arg2[%291] : memref<16xi32, #tpu.memory_space<smem>>
      %c8_i32_178 = arith.constant 8 : i32
      %c0_i32_179 = arith.constant 0 : i32
      %293 = arith.cmpi eq, %c8_i32_178, %c0_i32_179 : i32
      %c1_i32_180 = arith.constant 1 : i32
      %294 = arith.select %293, %c1_i32_180, %c8_i32_178 : i32
      %295 = arith.remsi %289, %294 : i32
      %c0_i32_181 = arith.constant 0 : i32
      %296 = arith.cmpi ne, %295, %c0_i32_181 : i32
      %c0_i32_182 = arith.constant 0 : i32
      %297 = arith.cmpi slt, %295, %c0_i32_182 : i32
      %c0_i32_183 = arith.constant 0 : i32
      %298 = arith.cmpi slt, %294, %c0_i32_183 : i32
      %299 = arith.xori %297, %298 : i1
      %300 = arith.andi %299, %296 : i1
      %301 = arith.addi %295, %294 : i32
      %302 = arith.select %300, %301, %295 : i32
      %c0_i32_184 = arith.constant 0 : i32
      %303 = tpu.memref_slice %arg3[%292, %c0_i32_184] : memref<64x128xf32, #tpu.memory_space<any>> -> memref<1x128xf32, #tpu.memory_space<any>>
      %c0_i32_185 = arith.constant 0 : i32
      %304 = tpu.memref_slice %arg6[%289, %c0_i32_185] : memref<8x128xf32, #tpu.memory_space<vmem>> -> memref<1x128xf32, #tpu.memory_space<vmem>>
      %305 = tpu.memref_slice %arg7[%302] : memref<8x!tpu.dma_semaphore, #tpu.memory_space<semaphore_mem>> -> memref<1x!tpu.dma_semaphore, #tpu.memory_space<semaphore_mem>>
      %306 = tpu.memref_squeeze %305 : memref<1x!tpu.dma_semaphore, #tpu.memory_space<semaphore_mem>> -> memref<!tpu.dma_semaphore, #tpu.memory_space<semaphore_mem>>
      tpu.enqueue_dma source(%303 : memref<1x128xf32, #tpu.memory_space<any>>) target(%304 : memref<1x128xf32, #tpu.memory_space<vmem>>) target_semaphore(%306 : memref<!tpu.dma_semaphore, #tpu.memory_space<semaphore_mem>>)
    } else {
    }
    %c8_i32_170 = arith.constant 8 : i32
    %c0 = arith.constant 0 : index
    %c0_171 = arith.constant 0 : index
    %283 = vector.load %arg6[%c0, %c0_171] : memref<8x128xf32, #tpu.memory_space<vmem>>, vector<8x128xf32>
    %c0_172 = arith.constant 0 : index
    %c0_173 = arith.constant 0 : index
    %284 = vector.load %arg4[%c0_172, %c0_173] : memref<8x128xf32, #tpu.memory_space<vmem>>, vector<8x128xf32>
    %285 = arith.addf %283, %284 : vector<8x128xf32>
    %c0_174 = arith.constant 0 : index
    %c0_175 = arith.constant 0 : index
    %c0_176 = arith.constant 0 : index
    %286 = vector.load %arg5[%c0_174, %c0_175, %c0_176] : memref<1x8x128xf32, #tpu.memory_space<vmem>>, vector<1x8x128xf32>
    %287 = vector.shape_cast %286 : vector<1x8x128xf32> to vector<8x128xf32>
    %288 = vector.shape_cast %285 : vector<8x128xf32> to vector<1x8x128xf32>
    tpu.vector_store %arg5[%c0_174, %c0_175, %c0_176], %288 {strides = array<i32>} : memref<1x8x128xf32, #tpu.memory_space<vmem>>, vector<1x8x128xf32>,
    return
  }
  func.func @transform_1(%arg0: i32, %arg1: i32, %arg2: memref<16xi32, #tpu.memory_space<smem>>) -> (i32, i32) {
    %c0_i32 = arith.constant 0 : i32
    %c0_i32_0 = arith.constant 0 : i32
    return %arg1, %c0_i32 : i32, i32
  }
  func.func @transform_2(%arg0: i32, %arg1: i32, %arg2: memref<16xi32, #tpu.memory_space<smem>>) -> (i32, i32, i32) {
    %c0_i32 = arith.constant 0 : i32
    %c0_i32_0 = arith.constant 0 : i32
    return %arg0, %arg1, %c0_i32 : i32, i32, i32
  }
}

</mosaic_0001>

<llo_original>
// kernel: tpu_custom_call.1
$region0: #{tpu_custom_call.1}
  #allocation0 [shape = 'u32[]', space=smem, size = 0x4, offset = 0x4, fixed_abs, tag = 'smem constant byte address 0x4 - core index']
  #allocation1 [shape = 'u32[144,128]{1,0:T(1,128)}', space=vmem, size = 0x12000, scoped, tag = 'internal scratch']
  #allocation2 [shape = 'f32[8,128]{1,0:T(8,128)}', space=vmem, size = 0x1000, scoped, tag = 'scratch operand']
  #allocation3 [shape = 's32[8]{0}', space=sflag, size = 0x20, scoped, tag = 'scratch operand']
  #allocation4 [shape = 's32[1]{0}', space=sflag, size = 0x4, scoped, tag = 'scoped memory for tpu_custom_call.1']
  #allocation5 [shape = 'u8[512]{0}', space=smem, size = 0x200, scoped, tag = 'prefetched SMEM operand 0']
  #allocation10 [shape = 's32[]', space=sflag, size = 0x4, offset = 0, fixed_abs, tag = 'sflag constant byte address 0x0 - dummy sync flag']
  #allocation11 [shape = 's32[]', space=sflag, size = 0x4, offset = 0, fixed_abs, tag = 'sflag constant byte address 0x0 - dummy sync flag']
  #allocation12 [shape = 'u32[]', space=smem, size = 0x4, offset = 0x44, fixed_abs, tag = 'smem constant byte address 0x44 - assertion arg 0']
  #allocation13 [shape = 'u32[]', space=smem, size = 0x4, offset = 0x48, fixed_abs, tag = 'smem constant byte address 0x48 - assertion arg 1']
  #allocation14 [shape = 's32[]', space=sflag, size = 0x4, offset = 0, fixed_abs, tag = 'sflag constant byte address 0x0 - dummy sync flag']
  #allocation15 [shape = 's32[]', space=sflag, size = 0x4, offset = 0, fixed_abs, tag = 'sflag constant byte address 0x0 - dummy sync flag']
  #allocation16 [shape = 's32[]', space=sflag, size = 0x4, offset = 0, fixed_abs, tag = 'sflag constant byte address 0x0 - dummy sync flag']
  #allocation17 [shape = 's32[]', space=sflag, size = 0x4, offset = 0, fixed_abs, tag = 'sflag constant byte address 0x0 - dummy sync flag']
  #allocation18 [shape = 's32[]', space=sflag, size = 0x4, offset = 0, fixed_abs, tag = 'sflag constant byte address 0x0 - dummy sync flag']
  #allocation19 [shape = 's32[]', space=sflag, size = 0x4, offset = 0, fixed_abs, tag = 'sflag constant byte address 0x0 - dummy sync flag']
  #allocation20 [shape = 's32[]', space=sflag, size = 0x4, offset = 0, fixed_abs, tag = 'sflag constant byte address 0x0 - dummy sync flag']
  #allocation21 [shape = 's32[]', space=sflag, size = 0x4, offset = 0, fixed_abs, tag = 'sflag constant byte address 0x0 - dummy sync flag']
  #allocation22 [shape = 's32[]', space=sflag, size = 0x4, offset = 0, fixed_abs, tag = 'sflag constant byte address 0x0 - dummy sync flag']
  #allocation23 [shape = 's32[]', space=sflag, size = 0x4, offset = 0, fixed_abs, tag = 'sflag constant byte address 0x0 - dummy sync flag']
  #allocation24 [shape = 's32[]', space=sflag, size = 0x4, offset = 0, fixed_abs, tag = 'sflag constant byte address 0x0 - dummy sync flag']
  #allocation25 [shape = 's32[]', space=sflag, size = 0x4, offset = 0, fixed_abs, tag = 'sflag constant byte address 0x0 - dummy sync flag']
  #allocation26 [shape = 's32[]', space=sflag, size = 0x4, offset = 0, fixed_abs, tag = 'sflag constant byte address 0x0 - dummy sync flag']
  #allocation27 [shape = 's32[]', space=sflag, size = 0x4, offset = 0, fixed_abs, tag = 'sflag constant byte address 0x0 - dummy sync flag']
  %s0 = inlined_call_operand.hbm [shape: s32[16], index: 0, kind: input, shape index: {}]
  %s1 = inlined_call_operand.hbm [shape: f32[64,128], index: 1, kind: input, shape index: {}]
  %s2 = inlined_call_operand.hbm [shape: f32[8,128], index: 2, kind: input, shape index: {}]
  %s3 = inlined_call_operand.hbm [shape: f32[2,8,128], index: 3, kind: output, shape index: {}]
  %s4 = sld [smem:[#allocation0]]
  $region73: #{tpu_custom_call.1} parent=0
    _
  %s6 = ssub.s32 1, %s4
  %s7 = scalar_select 0, %s6, %s4
  %9 = dma.hbm_to_smem %s0, 16, [#allocation5], [#allocation4]
  %10 = dma.done [#allocation4], 16
  %11 = sfence
  $region1: #{tpu_custom_call.1} parent=0
    #allocation6 [shape = 'u8[4096]{0}', space=vmem, size = 0x1000, scoped, tag = 'input window, operand 2, single buffered']
    #allocation7 [shape = 's32[2]{0}', space=sflag, size = 0x8, scoped, tag = 'scoped memory for tpu_custom_call.1']
    #allocation8 [shape = 's32[2]{0}', space=sflag, size = 0x8, scoped, tag = 'scoped memory for tpu_custom_call.1']
    #allocation9 [shape = 'u8[8192]{0}', space=vmem, size = 0x2000, scoped, tag = 'output window, operand 0']
    %12 = vsyncpa [#allocation7], 0
    %13 = vsyncpa [#allocation8], 0
    %s14 = scalar_lea.sflag [#allocation8], 1
    %15 = vsyncpa %s14, 0
    loop: start=0, step=1, limit=4
    $region2: #{tpu_custom_call.1} parent=1 // loop_pre_header
      _
    $region3: #{tpu_custom_call.1} parent=1 // loop_header
      %s17 = sphi 0, %s21
      %p18 = scmp.ge.s32.totalorder %s17, 4
      %s24 = sphi 0, %s36
      %s25 = sphi 0, %s32
      %s26 = sphi 0, %s24
      %s27 = sphi 0, %s25
      %s28 = sphi 0, %s26
      %s29 = sphi 0, %s27
      %s39 = sphi 0, %s41
      %s42 = sphi 0, %s39
      %s43 = sphi 0, %s42
      %s59 = sphi 0, %s43
      %s67 = sphi 0, %s69
      %s70 = sphi 0, %s67
      %s71 = sphi 0, %s70
      %s87 = sphi 0, %s71
    $region4: #{tpu_custom_call.1} parent=1 // loop_header_branch
      %20 = sbr.rel (%p18) target = $region8
    $region5: #{tpu_custom_call.1} parent=1 // loop_body
      %s22 = ssub.s32 %s17, 1
      %s23 = ssub.s32 %s17, 2
      %s30 = sadd.s32 1, %s25
      %p31 = scmp.ge.s32.totalorder %s30, 1
      %s32 = scalar_select %p31, 0, %s30
      %s33 = sadd.s32 1, %s24
      %s34 = scalar_select %p31, %s33, %s24
      %p35 = scmp.ge.s32.totalorder %s34, 2
      %s36 = scalar_select %p35, 0, %s34
      %s37 = ssub.s32 %s25, %s32
      %p38 = scmp.eq.s32.totalorder %s37, 0
      %s40 = sadd.s32 %s39, 1
      %s41 = scalar_select %p38, %s39, %s40
      %p44 = pneg %p38
      %p45 = scmp.eq.s32.totalorder %s17, 1
      %p46 = por %p44, %p45
      %p47 = scmp.ne.s32.totalorder %s39, %s42
      %p48 = scmp.eq.s32.totalorder %s17, 0
      %p49 = por %p47, %p48
      %p50 = scmp.ne.s32.totalorder %s39, %s42
      %p51 = scmp.eq.s32.totalorder %s22, 1
      %p52 = por %p50, %p51
      %p53 = scmp.ne.s32.totalorder %s42, %s43
      %p54 = scmp.eq.s32.totalorder %s22, 0
      %p55 = por %p53, %p54
      %p56 = scmp.ne.s32.totalorder %s42, %s43
      %p57 = scmp.eq.s32.totalorder %s23, 1
      %p58 = por %p56, %p57
      %p60 = scmp.ne.s32.totalorder %s43, %s59
      %p61 = scmp.eq.s32.totalorder %s23, 0
      %p62 = por %p60, %p61
      %s63 = ssub.s32 %s24, %s36
      %s64 = ssub.s32 %s25, %s32
      %s65 = sor.u32 %s63, %s64
      %p66 = scmp.eq.s32.totalorder %s65, 0
      %s68 = sadd.s32 %s67, 1
      %s69 = scalar_select %p66, %s67, %s68
      %p72 = pneg %p66
      %p73 = scmp.eq.s32.totalorder %s17, 1
      %p74 = por %p72, %p73
      %p75 = scmp.ne.s32.totalorder %s67, %s70
      %p76 = scmp.eq.s32.totalorder %s17, 0
      %p77 = por %p75, %p76
      %p78 = scmp.ne.s32.totalorder %s67, %s70
      %p79 = scmp.eq.s32.totalorder %s22, 1
      %p80 = por %p78, %p79
      %p81 = scmp.ne.s32.totalorder %s70, %s71
      %p82 = scmp.eq.s32.totalorder %s22, 0
      %p83 = por %p81, %p82
      %p84 = scmp.ne.s32.totalorder %s70, %s71
      %p85 = scmp.eq.s32.totalorder %s23, 1
      %p86 = por %p84, %p85
      %p88 = scmp.ne.s32.totalorder %s71, %s87
      %p89 = scmp.eq.s32.totalorder %s23, 0
      %p90 = por %p88, %p89
      %p91 = scmp.le.s32.totalorder 1, %s17
      %p92 = scmp.lt.s32.totalorder %s17, 3
      %p93 = pnand %p91, %p92
      %p94 = pneg %p93
      // Predicated region
      $region9: #{tpu_custom_call.1} parent=5 // pred_check
        _
      $region10: #{tpu_custom_call.1} parent=5 // pred_check_branch
        %96 = sbr.rel (%p93) target = $region12
      $region11: #{tpu_custom_call.1} parent=5 // pred_region
        %s97 = ssub.s32 %s17, 1
        // Predicated region
        $region13: #{tpu_custom_call.1} parent=11 // pred_check
          %p98 = pneg %p55
        $region14: #{tpu_custom_call.1} parent=11 // pred_check_branch
          %100 = sbr.rel (%p98) target = $region16
        $region15: #{tpu_custom_call.1} parent=11 // pred_region
          %s102 = ssub.s32 128, 128
          %103 = vsyncadd [#allocation7], %s102
          %s104 = smul.addr %s27, 128
          %s105 = scalar_lea.hbm %s2, %s104
          %s107 = sshll.u32 [#allocation6], 4
          %s108 = int_to_ptr.vmem [resolvable:$true] %s107
          %110 = dma.hbm_to_vmem [thread:$0]  %s105, 128, %s108, [#allocation7]
        $region16: #{tpu_custom_call.1} parent=11 // pred_fallthru
          _
      $region12: #{tpu_custom_call.1} parent=5 // pred_fallthru
        _
      %p111 = scmp.lt.s32.totalorder %s17, 2
      // Predicated region
      $region17: #{tpu_custom_call.1} parent=5 // pred_check
        %p112 = pneg %p111
      $region18: #{tpu_custom_call.1} parent=5 // pred_check_branch
        %114 = sbr.rel (%p112) target = $region20
      $region19: #{tpu_custom_call.1} parent=5 // pred_region
        _
      $region20: #{tpu_custom_call.1} parent=5 // pred_fallthru
        _
      %p115 = scmp.le.s32.totalorder 1, %s17
      %p116 = scmp.lt.s32.totalorder %s17, 3
      %p117 = pnand %p115, %p116
      %p118 = pneg %p117
      // Predicated region
      $region21: #{tpu_custom_call.1} parent=5 // pred_check
        _
      $region22: #{tpu_custom_call.1} parent=5 // pred_check_branch
        %120 = sbr.rel (%p117) target = $region24
      $region23: #{tpu_custom_call.1} parent=5 // pred_region
        %s121 = ssub.s32 %s17, 1
        // Predicated region
        $region25: #{tpu_custom_call.1} parent=23 // pred_check
          %p122 = pneg %p55
        $region26: #{tpu_custom_call.1} parent=23 // pred_check_branch
          %124 = sbr.rel (%p122) target = $region28
        $region27: #{tpu_custom_call.1} parent=23 // pred_region
          %125 = dma.done [#allocation7], 128
        $region28: #{tpu_custom_call.1} parent=23 // pred_fallthru
          _
        %p126 = pneg %p55
        %p127 = pneg %p52
        %p128 = pneg %p83
        %p129 = pneg %p80
        %s130 = sand.u32 %s70, 1
        %s131 = scalar_lea.sflag [#allocation8], %s130
        %s132 = sand.u32 %s70, 1
        %s133 = smul.addr %s132, 8
        %s134 = scalar_lea.vmem [#allocation9], %s133
        %s135 = smul.u32 %s26, 8
        %s136 = smul.u32 %s27, 8
        %s137 = sadd.s32 %s135, %s136
        %s138 = sld [smem:[#allocation5 + %s137]]
        %s139 = smul.addr %s138, 16
        %s140 = scalar_lea.hbm %s1, %s139
        // Predicated region
        $region29: #{tpu_custom_call.1} parent=23 // pred_check
          _
        $region30: #{tpu_custom_call.1} parent=23 // pred_check_branch
          %142 = sbr.rel target = $region32
        $region31: #{tpu_custom_call.1} parent=23 // pred_region
          %143 = sst [smem:[#allocation12]] [#allocation11]
          %144 = sst [smem:[#allocation13]] [#allocation10]
        $region32: #{tpu_custom_call.1} parent=23 // pred_fallthru
          _
        %146 = shalt.err (0)
        %s148 = sshll.u32 [#allocation2], 4
        %s149 = int_to_ptr.vmem [resolvable:$true] %s148
        %151 = dma.hbm_to_vmem [thread:$0]  %s140, 16, %s149, [#allocation3]
        %s152 = sadd.s32 %s137, 1
        %s153 = sld [smem:[#allocation5 + %s152]]
        %s154 = smul.addr %s153, 16
        %s155 = scalar_lea.hbm %s1, %s154
        %s156 = scalar_lea.vmem [#allocation2], 1
        %s157 = scalar_lea.sflag [#allocation3], 1
        // Predicated region
        $region33: #{tpu_custom_call.1} parent=23 // pred_check
          _
        $region34: #{tpu_custom_call.1} parent=23 // pred_check_branch
          %159 = sbr.rel target = $region36
        $region35: #{tpu_custom_call.1} parent=23 // pred_region
          %160 = sst [smem:[#allocation12]] [#allocation15]
          %161 = sst [smem:[#allocation13]] [#allocation14]
        $region36: #{tpu_custom_call.1} parent=23 // pred_fallthru
          _
        %163 = shalt.err (0)
        %s165 = sshll.u32 %s156, 4
        %s166 = int_to_ptr.vmem [resolvable:$true] %s165
        %168 = dma.hbm_to_vmem [thread:$0]  %s155, 16, %s166, %s157
        %s169 = sadd.s32 %s137, 2
        %s170 = sld [smem:[#allocation5 + %s169]]
        %s171 = smul.addr %s170, 16
        %s172 = scalar_lea.hbm %s1, %s171
        %s173 = scalar_lea.vmem [#allocation2], 2
        %s174 = scalar_lea.sflag [#allocation3], 2
        // Predicated region
        $region37: #{tpu_custom_call.1} parent=23 // pred_check
          _
        $region38: #{tpu_custom_call.1} parent=23 // pred_check_branch
          %176 = sbr.rel target = $region40
        $region39: #{tpu_custom_call.1} parent=23 // pred_region
          %177 = sst [smem:[#allocation12]] [#allocation17]
          %178 = sst [smem:[#allocation13]] [#allocation16]
        $region40: #{tpu_custom_call.1} parent=23 // pred_fallthru
          _
        %180 = shalt.err (0)
        %s182 = sshll.u32 %s173, 4
        %s183 = int_to_ptr.vmem [resolvable:$true] %s182
        %185 = dma.hbm_to_vmem [thread:$0]  %s172, 16, %s183, %s174
        %s186 = sadd.s32 %s137, 3
        %s187 = sld [smem:[#allocation5 + %s186]]
        %s188 = smul.addr %s187, 16
        %s189 = scalar_lea.hbm %s1, %s188
        %s190 = scalar_lea.vmem [#allocation2], 3
        %s191 = scalar_lea.sflag [#allocation3], 3
        // Predicated region
        $region41: #{tpu_custom_call.1} parent=23 // pred_check
          _
        $region42: #{tpu_custom_call.1} parent=23 // pred_check_branch
          %193 = sbr.rel target = $region44
        $region43: #{tpu_custom_call.1} parent=23 // pred_region
          %194 = sst [smem:[#allocation12]] [#allocation19]
          %195 = sst [smem:[#allocation13]] [#allocation18]
        $region44: #{tpu_custom_call.1} parent=23 // pred_fallthru
          _
        %197 = shalt.err (0)
        %s199 = sshll.u32 %s190, 4
        %s200 = int_to_ptr.vmem [resolvable:$true] %s199
        %202 = dma.hbm_to_vmem [thread:$0]  %s189, 16, %s200, %s191
        %s203 = sadd.s32 %s137, 4
        %s204 = sld [smem:[#allocation5 + %s203]]
        %s205 = smul.addr %s204, 16
        %s206 = scalar_lea.hbm %s1, %s205
        %s207 = scalar_lea.vmem [#allocation2], 4
        %s208 = scalar_lea.sflag [#allocation3], 4
        // Predicated region
        $region45: #{tpu_custom_call.1} parent=23 // pred_check
          _
        $region46: #{tpu_custom_call.1} parent=23 // pred_check_branch
          %210 = sbr.rel target = $region48
        $region47: #{tpu_custom_call.1} parent=23 // pred_region
          %211 = sst [smem:[#allocation12]] [#allocation21]
          %212 = sst [smem:[#allocation13]] [#allocation20]
        $region48: #{tpu_custom_call.1} parent=23 // pred_fallthru
          _
        %214 = shalt.err (0)
        %s216 = sshll.u32 %s207, 4
        %s217 = int_to_ptr.vmem [resolvable:$true] %s216
        %219 = dma.hbm_to_vmem [thread:$0]  %s206, 16, %s217, %s208
        %s220 = sadd.s32 %s137, 5
        %s221 = sld [smem:[#allocation5 + %s220]]
        %s222 = smul.addr %s221, 16
        %s223 = scalar_lea.hbm %s1, %s222
        %s224 = scalar_lea.vmem [#allocation2], 5
        %s225 = scalar_lea.sflag [#allocation3], 5
        // Predicated region
        $region49: #{tpu_custom_call.1} parent=23 // pred_check
          _
        $region50: #{tpu_custom_call.1} parent=23 // pred_check_branch
          %227 = sbr.rel target = $region52
        $region51: #{tpu_custom_call.1} parent=23 // pred_region
          %228 = sst [smem:[#allocation12]] [#allocation23]
          %229 = sst [smem:[#allocation13]] [#allocation22]
        $region52: #{tpu_custom_call.1} parent=23 // pred_fallthru
          _
        %231 = shalt.err (0)
        %s233 = sshll.u32 %s224, 4
        %s234 = int_to_ptr.vmem [resolvable:$true] %s233
        %236 = dma.hbm_to_vmem [thread:$0]  %s223, 16, %s234, %s225
        %s237 = sadd.s32 %s137, 6
        %s238 = sld [smem:[#allocation5 + %s237]]
        %s239 = smul.addr %s238, 16
        %s240 = scalar_lea.hbm %s1, %s239
        %s241 = scalar_lea.vmem [#allocation2], 6
        %s242 = scalar_lea.sflag [#allocation3], 6
        // Predicated region
        $region53: #{tpu_custom_call.1} parent=23 // pred_check
          _
        $region54: #{tpu_custom_call.1} parent=23 // pred_check_branch
          %244 = sbr.rel target = $region56
        $region55: #{tpu_custom_call.1} parent=23 // pred_region
          %245 = sst [smem:[#allocation12]] [#allocation25]
          %246 = sst [smem:[#allocation13]] [#allocation24]
        $region56: #{tpu_custom_call.1} parent=23 // pred_fallthru
          _
        %248 = shalt.err (0)
        %s250 = sshll.u32 %s241, 4
        %s251 = int_to_ptr.vmem [resolvable:$true] %s250
        %253 = dma.hbm_to_vmem [thread:$0]  %s240, 16, %s251, %s242
        %s254 = sadd.s32 %s137, 7
        %s255 = sld [smem:[#allocation5 + %s254]]
        %s256 = smul.addr %s255, 16
        %s257 = scalar_lea.hbm %s1, %s256
        %s258 = scalar_lea.vmem [#allocation2], 7
        %s259 = scalar_lea.sflag [#allocation3], 7
        // Predicated region
        $region57: #{tpu_custom_call.1} parent=23 // pred_check
          _
        $region58: #{tpu_custom_call.1} parent=23 // pred_check_branch
          %261 = sbr.rel target = $region60
        $region59: #{tpu_custom_call.1} parent=23 // pred_region
          %262 = sst [smem:[#allocation12]] [#allocation27]
          %263 = sst [smem:[#allocation13]] [#allocation26]
        $region60: #{tpu_custom_call.1} parent=23 // pred_fallthru
          _
        %265 = shalt.err (0)
        %s267 = sshll.u32 %s258, 4
        %s268 = int_to_ptr.vmem [resolvable:$true] %s267
        %270 = dma.hbm_to_vmem [thread:$0]  %s257, 16, %s268, %s259
        %s271 = smul.u32 1, 1
        %s272 = sshll.u32 %s271, 4
        %273 = dma.done [#allocation3], %s272
        %s274 = sshll.u32 %s271, 4
        %275 = dma.done %s157, %s274
        %s276 = sshll.u32 %s271, 4
        %277 = dma.done %s174, %s276
        %s278 = sshll.u32 %s271, 4
        %279 = dma.done %s191, %s278
        %s280 = sshll.u32 %s271, 4
        %281 = dma.done %s208, %s280
        %s282 = sshll.u32 %s271, 4
        %283 = dma.done %s225, %s282
        %s284 = sshll.u32 %s271, 4
        %285 = dma.done %s242, %s284
        %s286 = sshll.u32 %s271, 4
        %287 = dma.done %s259, %s286
        %v288 = vld [vmem:[#allocation2] sm:$0xff]
        %v289 = vld [vmem:[#allocation6] sm:$0xff]
        %v290 = vadd.f32 %v288, %v289
        %291 = vst [vmem:[%s134] sm:$0xff] %v290
        %s292 = sand.u32 %s70, 1
        %s293 = scalar_lea.sflag [#allocation8], %s292
        %s294 = sand.u32 %s70, 1
        %s295 = smul.addr %s294, 8
        %s296 = scalar_lea.vmem [#allocation9], %s295
        // Predicated region
        $region61: #{tpu_custom_call.1} parent=23 // pred_check
          %p297 = pneg %p80
        $region62: #{tpu_custom_call.1} parent=23 // pred_check_branch
          %299 = sbr.rel (%p297) target = $region64
        $region63: #{tpu_custom_call.1} parent=23 // pred_region
          %s301 = ssub.s32 128, 128
          %302 = vsyncadd %s293, %s301
          %s303 = sadd.s32 %s27, %s26
          %s304 = smul.addr %s303, 128
          %s305 = scalar_lea.hbm %s3, %s304
          %s307 = sshll.u32 %s296, 4
          %s308 = int_to_ptr.vmem [resolvable:$true] %s307
          %310 = dma.vmem_to_hbm [thread:$0]  %s308, 128, %s305, %s293
        $region64: #{tpu_custom_call.1} parent=23 // pred_fallthru
          _
      $region24: #{tpu_custom_call.1} parent=5 // pred_fallthru
        _
      %p311 = scmp.le.s32.totalorder 2, %s17
      // Predicated region
      $region65: #{tpu_custom_call.1} parent=5 // pred_check
        %p312 = pneg %p311
      $region66: #{tpu_custom_call.1} parent=5 // pred_check_branch
        %314 = sbr.rel (%p312) target = $region68
      $region67: #{tpu_custom_call.1} parent=5 // pred_region
        %s315 = ssub.s32 %s17, 2
        // Predicated region
        $region69: #{tpu_custom_call.1} parent=67 // pred_check
          %p316 = pneg %p86
        $region70: #{tpu_custom_call.1} parent=67 // pred_check_branch
          %318 = sbr.rel (%p316) target = $region72
        $region71: #{tpu_custom_call.1} parent=67 // pred_region
          %s319 = sand.u32 %s71, 1
          %s320 = scalar_lea.sflag [#allocation8], %s319
          %s321 = sand.u32 %s71, 1
          %s322 = smul.addr %s321, 8
          %s323 = scalar_lea.vmem [#allocation9], %s322
          %324 = dma.done %s320, 128
        $region72: #{tpu_custom_call.1} parent=67 // pred_fallthru
          _
      $region68: #{tpu_custom_call.1} parent=5 // pred_fallthru
        _
    $region6: #{tpu_custom_call.1} parent=1 // loop_footer
      %s21 = sadd.s32 1, %s17
    $region7: #{tpu_custom_call.1} parent=1 // loop_footer_branch
      %16 = sbr.rel target = $region3
    $region8: #{tpu_custom_call.1} parent=1 // loop_exit
      _
    %325 = vsyncpa [#allocation7], 1
    %s326 = scalar_lea.sflag [#allocation7], 1
    %327 = vsyncpa %s326, 1
    %328 = vsyncpa [#allocation8], 1
    %s329 = scalar_lea.sflag [#allocation8], 1
    %330 = vsyncpa %s329, 1
  %331 = vsyncmov [#allocation3]
  %s332 = vpop.sfrf %331
  %p333 = scmp.eq.s32.totalorder %s332, 0
  %p334 = pneg %p333
  %336 = shalt.err (%p334)
  %s337 = scalar_lea.sflag [#allocation3], 1
  %338 = vsyncmov %s337
  %s339 = vpop.sfrf %338
  %p340 = scmp.eq.s32.totalorder %s339, 0
  %p341 = pneg %p340
  %343 = shalt.err (%p341)
  %s344 = scalar_lea.sflag [#allocation3], 2
  %345 = vsyncmov %s344
  %s346 = vpop.sfrf %345
  %p347 = scmp.eq.s32.totalorder %s346, 0
  %p348 = pneg %p347
  %350 = shalt.err (%p348)
  %s351 = scalar_lea.sflag [#allocation3], 3
  %352 = vsyncmov %s351
  %s353 = vpop.sfrf %352
  %p354 = scmp.eq.s32.totalorder %s353, 0
  %p355 = pneg %p354
  %357 = shalt.err (%p355)
  %s358 = scalar_lea.sflag [#allocation3], 4
  %359 = vsyncmov %s358
  %s360 = vpop.sfrf %359
  %p361 = scmp.eq.s32.totalorder %s360, 0
  %p362 = pneg %p361
  %364 = shalt.err (%p362)
  %s365 = scalar_lea.sflag [#allocation3], 5
  %366 = vsyncmov %s365
  %s367 = vpop.sfrf %366
  %p368 = scmp.eq.s32.totalorder %s367, 0
  %p369 = pneg %p368
  %371 = shalt.err (%p369)
  %s372 = scalar_lea.sflag [#allocation3], 6
  %373 = vsyncmov %s372
  %s374 = vpop.sfrf %373
  %p375 = scmp.eq.s32.totalorder %s374, 0
  %p376 = pneg %p375
  %378 = shalt.err (%p376)
  %s379 = scalar_lea.sflag [#allocation3], 7
  %380 = vsyncmov %s379
  %s381 = vpop.sfrf %380
  %p382 = scmp.eq.s32.totalorder %s381, 0
  %p383 = pneg %p382
  %385 = shalt.err (%p383)

</llo_original>
